<compile_context>
chip_gen: v5e
topology: v5e:2x2
jax: 0.10.0
libtpu: 0.0.40
codegen_flags: <defaults>
</compile_context>

<pallas_src>
import math
import numpy as np
import jax
import jax.numpy as jnp
from jax import lax
from jax.experimental import pallas as pl
from jax.experimental.pallas import tpu as pltpu

SEQ_LEN = 16
PRED_LEN = 8
HIDDEN = 512
KERNEL_SIZE = 25  # moving average window (from the module)


def _round_up(a, b):
    return (a + b - 1) // b * b


def _default_m_tile():
    """256-row M tiles for v6e/v7x (2x256^2 MXU), 128 for v5e (4x128^2 MXU)."""
    try:
        kind = jax.devices()[0].device_kind.lower()
        if "v5 lite" in kind or "v5e" in kind:
            return 128
    except Exception:
        pass
    return 256


def _gelu_exact(x):
    # nn.GELU() default = exact erf-based GELU (used only by the f32 reference).
    return 0.5 * x * (1.0 + lax.erf(x * (1.0 / math.sqrt(2.0))))


def _gelu_tanh(x):
    # tanh-approx GELU: transcendental goes to the EUP slot instead of a VALU erf poly.
    c = 0.7978845608028654  # sqrt(2/pi)
    return 0.5 * x * (1.0 + jnp.tanh(c * (x + 0.044715 * x * x * x)))


def _build_moving_avg_matrix(L, k):
    """L x L matrix A s.t. trend = x @ A reproduces moving_avg with edge replication."""
    pad = (k - 1) // 2
    A = np.zeros((L, L), dtype=np.float32)
    for t in range(L):
        for j in range(k):
            p = t + j                       # index in padded series of length L + 2*pad
            src = min(max(p - pad, 0), L - 1)
            A[src, t] += 1.0 / k
    return jnp.asarray(A)


def _make_kernel(transpose_out):
    def kernel(x_ref, w1_ref, b1_ref, w2_ref, s2_ref, b2_ref,
               w3_ref, b3_ref, wt_ref, bt_ref, o_ref):
        # x_ref: (TM, L) block of flattened (B*C, L) series, time on the lane axis.
        x = x_ref[...]                                            # (TM, L) f32

        # instance normalization over the time axis (per series), unbiased=False
        mean = jnp.mean(x, axis=-1, keepdims=True)                # (TM, 1)
        xc = x - mean
        var = jnp.mean(xc * xc, axis=-1, keepdims=True)
        std = jnp.sqrt(var + 1e-5)
        inv_std = 1.0 / std
        xn = (xc * inv_std).astype(jnp.bfloat16)                  # (TM, L) bf16

        # seasonal MLP with the decomposition folded into W1' = (I - A) @ W1.
        h = jnp.dot(xn, w1_ref[...],
                    preferred_element_type=jnp.float32) + b1_ref[...]
        h = _gelu_tanh(h).astype(jnp.bfloat16)                    # (TM, H) bf16

        # W2 is int8 with per-output-column scale: dequant cast -> bf16 matmul -> scale.
        w2 = w2_ref[...].astype(jnp.float32).astype(jnp.bfloat16)
        h = jnp.dot(h, w2,
                    preferred_element_type=jnp.float32) * s2_ref[...] + b2_ref[...]
        h = _gelu_tanh(h).astype(jnp.bfloat16)                    # (TM, H) bf16

        sea = jnp.dot(h, w3_ref[...],
                      preferred_element_type=jnp.float32) + b3_ref[...]

        # trend MLP with the moving average folded into Wt' = A @ Wt.
        tre = jnp.dot(xn, wt_ref[...],
                      preferred_element_type=jnp.float32) + bt_ref[...]

        # de-normalize
        y = (sea + tre) * std + mean                              # (TM, P) f32
        if transpose_out:
            o_ref[...] = y.T                                      # (P, TM) lane-dense
        else:
            o_ref[...] = y                                        # (TM, P)
    return kernel


def model_forward(x, params, m_tile=None):
    """x: (B, seq_len, C) float32 -> (B, pred_len, C) float32"""
    B, L, C = x.shape
    H = params["w1"].shape[1]
    P = params["wt"].shape[1]
    M = B * C

    if m_tile is None:
        m_tile = _default_m_tile()

    # Tile selection: minimize padded rows; split one big tile so ("parallel",) can
    # shard across v7x's two TensorCores when there is enough compute to matter.
    n_tiles = max(1, -(-M // m_tile))
    if n_tiles == 1 and M >= 256:
        n_tiles = 2
    TM = _round_up(-(-M // n_tiles), 8)
    M_pad = n_tiles * TM

    # Lane-dense transposed output only when it helps and obeys the block constraint
    # (last dim must be a multiple of 128 or span the full array).
    transpose_out = TM >= 128 and (n_tiles == 1 or TM % 128 == 0)

    # flatten (B, C) -> M rows of independent length-L series (small activation slab)
    xt = jnp.transpose(x, (0, 2, 1)).reshape(M, L)
    if M_pad != M:
        xt = jnp.pad(xt, ((0, M_pad - M), (0, 0)))   # zero rows -> benign compute

    full = lambda shape: pl.BlockSpec(shape, lambda i, _s=shape: (0,) * len(_s))

    if transpose_out:
        out_shape = jax.ShapeDtypeStruct((P, M_pad), jnp.float32)
        out_spec = pl.BlockSpec((P, TM), lambda i: (0, i))
    else:
        out_shape = jax.ShapeDtypeStruct((M_pad, P), jnp.float32)
        out_spec = pl.BlockSpec((TM, P), lambda i: (i, 0))

    out = pl.pallas_call(
        _make_kernel(transpose_out),
        out_shape=out_shape,
        grid_spec=pltpu.PrefetchScalarGridSpec(
            num_scalar_prefetch=0,
            grid=(n_tiles,),
            in_specs=[
                pl.BlockSpec((TM, L), lambda i: (i, 0)),          # activations (M-tiled)
                full((L, H)), full((1, H)),                       # W1' bf16, b1 f32
                full((H, H)), full((1, H)), full((1, H)),         # W2 int8, s2 f32, b2 f32
                full((H, P)), full((1, P)),                       # W3 bf16, b3 f32
                full((L, P)), full((1, P)),                       # Wt' bf16, bt f32
            ],
            out_specs=out_spec,
        ),
        compiler_params=pltpu.CompilerParams(
            dimension_semantics=("parallel",)),                   # shard M tiles across TCs
    )(xt, params["w1"], params["b1"], params["w2q"], params["s2"], params["b2"],
      params["w3"], params["b3"], params["wt"], params["bt"])

    if transpose_out:
        out = out[:, :M].reshape(P, B, C)                         # (P, B, C)
        return jnp.transpose(out, (1, 0, 2))                      # (B, P, C)
    out = out[:M].reshape(B, C, P)                                # (B, C, P)
    return jnp.transpose(out, (0, 2, 1))                          # (B, P, C)


def init_params(key, seq_len, pred_len, hidden):
    """Deterministic init mimicking nn.Linear (uniform +-1/sqrt(fan_in)); weights as (in, out).

    Returns (kernel_params, ref_params):
      kernel_params: decomposition folded into W1/Wt (f32 fold -> bf16 cast), W2 as int8
      with per-output-column f32 scale, other weights bf16, biases f32.
      ref_params: the original f32 weights + the moving-average matrix for the reference.
    """
    ks = jax.random.split(key, 8)

    def lin(k_w, k_b, fan_in, fan_out):
        bound = 1.0 / math.sqrt(fan_in)
        w = jax.random.uniform(k_w, (fan_in, fan_out), jnp.float32, -bound, bound)
        b = jax.random.uniform(k_b, (1, fan_out), jnp.float32, -bound, bound)
        return w, b

    w1, b1 = lin(ks[0], ks[1], seq_len, hidden)
    w2, b2 = lin(ks[2], ks[3], hidden, hidden)
    w3, b3 = lin(ks[4], ks[5], hidden, pred_len)
    wt, bt = lin(ks[6], ks[7], seq_len, pred_len)

    A = _build_moving_avg_matrix(seq_len, KERNEL_SIZE)            # trend = xn @ A
    I = jnp.eye(seq_len, dtype=jnp.float32)
    w1_fold = (I - A) @ w1                                        # seasonal path (f32 fold)
    wt_fold = A @ wt                                              # trend path    (f32 fold)

    # symmetric per-output-column int8 quantization of the dominant 512x512 weight
    col_max = jnp.maximum(jnp.max(jnp.abs(w2), axis=0, keepdims=True), 1e-8)
    s2 = col_max / 127.0                                          # (1, H) f32
    w2q = jnp.clip(jnp.round(w2 / s2), -127, 127).astype(jnp.int8)

    kernel_params = {
        "w1": w1_fold.astype(jnp.bfloat16), "b1": b1,
        "w2q": w2q, "s2": s2, "b2": b2,
        "w3": w3.astype(jnp.bfloat16), "b3": b3,
        "wt": wt_fold.astype(jnp.bfloat16), "bt": bt,
    }
    ref_params = {"A": A, "w1": w1, "b1": b1, "w2": w2, "b2": b2,
                  "w3": w3, "b3": b3, "wt": wt, "bt": bt}
    return kernel_params, ref_params


def _reference_forward(x, ref):
    """Pure-JAX f32 reference (original un-folded/un-quantized weights, exact GELU)."""
    mean = jnp.mean(x, axis=1, keepdims=True)
    xc = x - mean
    std = jnp.sqrt(jnp.mean(xc * xc, axis=1, keepdims=True) + 1e-5)
    xn = xc / std
    xt = jnp.transpose(xn, (0, 2, 1))                             # (B, C, L)
    trend = jnp.einsum("bcl,lm->bcm", xt, ref["A"])
    seasonal = xt - trend
    h = _gelu_exact(jnp.einsum("bcl,lh->bch", seasonal, ref["w1"]) + ref["b1"])
    h = _gelu_exact(jnp.einsum("bch,hk->bck", h, ref["w2"]) + ref["b2"])
    sea = jnp.einsum("bch,hp->bcp", h, ref["w3"]) + ref["b3"]
    tre = jnp.einsum("bcl,lp->bcp", trend, ref["wt"]) + ref["bt"]
    out = jnp.transpose(sea + tre, (0, 2, 1))                     # (B, P, C)
    return out * std + mean


if __name__ == "__main__":
    B, C = 2, 4
    key = jax.random.PRNGKey(0)
    k_x, k_p = jax.random.split(key)
    x = jax.random.normal(k_x, (B, SEQ_LEN, C), dtype=jnp.float32)
    params, ref_params = init_params(k_p, SEQ_LEN, PRED_LEN, HIDDEN)

    out = jax.block_until_ready(model_forward(x, params))
    assert out.shape == (B, PRED_LEN, C), out.shape

    ref = jax.block_until_ready(_reference_forward(x, ref_params))
    # Tolerance covers bf16 weights/activations, int8 W2 (per-column scale) and
    # tanh-approx GELU; accumulation is f32 throughout.
    np.testing.assert_allclose(np.asarray(out), np.asarray(ref), rtol=4e-2, atol=4e-2)

    print("KERNEL_OK")
</pallas_src>

<mosaic_0001>
module attributes {stable_mosaic.version = 11 : i64} {
  func.func @kernel(%arg0: i32, %arg1: memref<8x16xf32, #tpu.memory_space<vmem>>, %arg2: memref<16x512xbf16, #tpu.memory_space<vmem>>, %arg3: memref<1x512xf32, #tpu.memory_space<vmem>>, %arg4: memref<512x512xi8, #tpu.memory_space<vmem>>, %arg5: memref<1x512xf32, #tpu.memory_space<vmem>>, %arg6: memref<1x512xf32, #tpu.memory_space<vmem>>, %arg7: memref<512x8xbf16, #tpu.memory_space<vmem>>, %arg8: memref<1x8xf32, #tpu.memory_space<vmem>>, %arg9: memref<16x8xbf16, #tpu.memory_space<vmem>>, %arg10: memref<1x8xf32, #tpu.memory_space<vmem>>, %arg11: memref<8x8xf32, #tpu.memory_space<vmem>>) attributes {dimension_semantics = [#tpu.dimension_semantics<parallel>], iteration_bounds = array<i64: 1>, scalar_prefetch = 0 : i64, scratch_operands = 0 : i64, tpu.core_type = #tpu.core_type<tc>, window_params = [{transform_indices = @transform_0, window_bounds = array<i64: 8, 16>}, {pipeline_mode = #tpu.pipeline_mode<synchronous>, transform_indices = @transform_1, window_bounds = array<i64: 16, 512>}, {pipeline_mode = #tpu.pipeline_mode<synchronous>, transform_indices = @transform_2, window_bounds = array<i64: 1, 512>}, {pipeline_mode = #tpu.pipeline_mode<synchronous>, transform_indices = @transform_3, window_bounds = array<i64: 512, 512>}, {pipeline_mode = #tpu.pipeline_mode<synchronous>, transform_indices = @transform_4, window_bounds = array<i64: 1, 512>}, {pipeline_mode = #tpu.pipeline_mode<synchronous>, transform_indices = @transform_5, window_bounds = array<i64: 1, 512>}, {pipeline_mode = #tpu.pipeline_mode<synchronous>, transform_indices = @transform_6, window_bounds = array<i64: 512, 8>}, {pipeline_mode = #tpu.pipeline_mode<synchronous>, transform_indices = @transform_7, window_bounds = array<i64: 1, 8>}, {pipeline_mode = #tpu.pipeline_mode<synchronous>, transform_indices = @transform_8, window_bounds = array<i64: 16, 8>}, {pipeline_mode = #tpu.pipeline_mode<synchronous>, transform_indices = @transform_9, window_bounds = array<i64: 1, 8>}, {transform_indices = @transform_10, window_bounds = array<i64: 8, 8>}]} {
    %c0 = arith.constant 0 : index
    %c0_0 = arith.constant 0 : index
    %0 = vector.load %arg1[%c0, %c0_0] : memref<8x16xf32, #tpu.memory_space<vmem>>, vector<8x16xf32>
    %cst = arith.constant dense<0.000000e+00> : vector<8xf32>
    %1 = vector.multi_reduction <add>, %0, %cst [1] : vector<8x16xf32> to vector<8xf32>
    %2 = vector.shape_cast %1 : vector<8xf32> to vector<8x1xf32>
    %cst_1 = arith.constant 1.600000e+01 : f32
    %3 = vector.broadcast %cst_1 : f32 to vector<8x1xf32>
    %4 = arith.divf %2, %3 : vector<8x1xf32>
    %5 = vector.broadcast %4 : vector<8x1xf32> to vector<8x16xf32>
    %6 = arith.subf %0, %5 : vector<8x16xf32>
    %7 = arith.mulf %6, %6 : vector<8x16xf32>
    %cst_2 = arith.constant dense<0.000000e+00> : vector<8xf32>
    %8 = vector.multi_reduction <add>, %7, %cst_2 [1] : vector<8x16xf32> to vector<8xf32>
    %9 = vector.shape_cast %8 : vector<8xf32> to vector<8x1xf32>
    %cst_3 = arith.constant 1.600000e+01 : f32
    %10 = vector.broadcast %cst_3 : f32 to vector<8x1xf32>
    %11 = arith.divf %9, %10 : vector<8x1xf32>
    %cst_4 = arith.constant 9.99999974E-6 : f32
    %12 = vector.broadcast %cst_4 : f32 to vector<8x1xf32>
    %13 = arith.addf %11, %12 : vector<8x1xf32>
    %14 = math.sqrt %13 : vector<8x1xf32>
    %cst_5 = arith.constant 1.000000e+00 : f32
    %15 = vector.broadcast %cst_5 : f32 to vector<8x1xf32>
    %16 = arith.divf %15, %14 : vector<8x1xf32>
    %17 = vector.broadcast %16 : vector<8x1xf32> to vector<8x16xf32>
    %18 = arith.mulf %6, %17 : vector<8x16xf32>
    %19 = arith.truncf %18 : vector<8x16xf32> to vector<8x16xbf16>
    %c0_6 = arith.constant 0 : index
    %c0_7 = arith.constant 0 : index
    %20 = vector.load %arg2[%c0_6, %c0_7] : memref<16x512xbf16, #tpu.memory_space<vmem>>, vector<16x512xbf16>
    %cst_8 = arith.constant dense<0.000000e+00> : vector<8x512xf32>
    %21 = tpu.matmul %19, %20, %cst_8 {dimension_numbers = #tpu.dot_dimension_numbers<[1], [0], [0], [1], [0, 0, 1, 1], [], []>} : vector<8x16xbf16>, vector<16x512xbf16>, vector<8x512xf32> -> vector<8x512xf32>
    %c0_9 = arith.constant 0 : index
    %c0_10 = arith.constant 0 : index
    %22 = vector.load %arg3[%c0_9, %c0_10] : memref<1x512xf32, #tpu.memory_space<vmem>>, vector<1x512xf32>
    %23 = vector.broadcast %22 : vector<1x512xf32> to vector<8x512xf32>
    %24 = arith.addf %21, %23 : vector<8x512xf32>
    %cst_11 = arith.constant 5.000000e-01 : f32
    %25 = vector.broadcast %cst_11 : f32 to vector<8x512xf32>
    %26 = arith.mulf %25, %24 : vector<8x512xf32>
    %cst_12 = arith.constant 4.471500e-02 : f32
    %27 = vector.broadcast %cst_12 : f32 to vector<8x512xf32>
    %28 = arith.mulf %27, %24 : vector<8x512xf32>
    %29 = arith.mulf %28, %24 : vector<8x512xf32>
    %30 = arith.mulf %29, %24 : vector<8x512xf32>
    %31 = arith.addf %24, %30 : vector<8x512xf32>
    %cst_13 = arith.constant 0.797884583 : f32
    %32 = vector.broadcast %cst_13 : f32 to vector<8x512xf32>
    %33 = arith.mulf %32, %31 : vector<8x512xf32>
    %34 = math.tanh %33 : vector<8x512xf32>
    %cst_14 = arith.constant 1.000000e+00 : f32
    %35 = vector.broadcast %cst_14 : f32 to vector<8x512xf32>
    %36 = arith.addf %35, %34 : vector<8x512xf32>
    %37 = arith.mulf %26, %36 : vector<8x512xf32>
    %38 = arith.truncf %37 : vector<8x512xf32> to vector<8x512xbf16>
    %c0_15 = arith.constant 0 : index
    %c0_16 = arith.constant 0 : index
    %39 = vector.load %arg4[%c0_15, %c0_16] : memref<512x512xi8, #tpu.memory_space<vmem>>, vector<512x512xi8>
    %40 = arith.sitofp %39 : vector<512x512xi8> to vector<512x512xf32>
    %41 = arith.truncf %40 : vector<512x512xf32> to vector<512x512xbf16>
    %cst_17 = arith.constant dense<0.000000e+00> : vector<8x512xf32>
    %42 = tpu.matmul %38, %41, %cst_17 {dimension_numbers = #tpu.dot_dimension_numbers<[1], [0], [0], [1], [0, 0, 1, 1], [], []>} : vector<8x512xbf16>, vector<512x512xbf16>, vector<8x512xf32> -> vector<8x512xf32>
    %c0_18 = arith.constant 0 : index
    %c0_19 = arith.constant 0 : index
    %43 = vector.load %arg5[%c0_18, %c0_19] : memref<1x512xf32, #tpu.memory_space<vmem>>, vector<1x512xf32>
    %44 = vector.broadcast %43 : vector<1x512xf32> to vector<8x512xf32>
    %45 = arith.mulf %42, %44 : vector<8x512xf32>
    %c0_20 = arith.constant 0 : index
    %c0_21 = arith.constant 0 : index
    %46 = vector.load %arg6[%c0_20, %c0_21] : memref<1x512xf32, #tpu.memory_space<vmem>>, vector<1x512xf32>
    %47 = vector.broadcast %46 : vector<1x512xf32> to vector<8x512xf32>
    %48 = arith.addf %45, %47 : vector<8x512xf32>
    %cst_22 = arith.constant 5.000000e-01 : f32
    %49 = vector.broadcast %cst_22 : f32 to vector<8x512xf32>
    %50 = arith.mulf %49, %48 : vector<8x512xf32>
    %cst_23 = arith.constant 4.471500e-02 : f32
    %51 = vector.broadcast %cst_23 : f32 to vector<8x512xf32>
    %52 = arith.mulf %51, %48 : vector<8x512xf32>
    %53 = arith.mulf %52, %48 : vector<8x512xf32>
    %54 = arith.mulf %53, %48 : vector<8x512xf32>
    %55 = arith.addf %48, %54 : vector<8x512xf32>
    %cst_24 = arith.constant 0.797884583 : f32
    %56 = vector.broadcast %cst_24 : f32 to vector<8x512xf32>
    %57 = arith.mulf %56, %55 : vector<8x512xf32>
    %58 = math.tanh %57 : vector<8x512xf32>
    %cst_25 = arith.constant 1.000000e+00 : f32
    %59 = vector.broadcast %cst_25 : f32 to vector<8x512xf32>
    %60 = arith.addf %59, %58 : vector<8x512xf32>
    %61 = arith.mulf %50, %60 : vector<8x512xf32>
    %62 = arith.truncf %61 : vector<8x512xf32> to vector<8x512xbf16>
    %c0_26 = arith.constant 0 : index
    %c0_27 = arith.constant 0 : index
    %63 = vector.load %arg7[%c0_26, %c0_27] : memref<512x8xbf16, #tpu.memory_space<vmem>>, vector<512x8xbf16>
    %cst_28 = arith.constant dense<0.000000e+00> : vector<8x8xf32>
    %64 = tpu.matmul %62, %63, %cst_28 {dimension_numbers = #tpu.dot_dimension_numbers<[1], [0], [0], [1], [0, 0, 1, 1], [], []>} : vector<8x512xbf16>, vector<512x8xbf16>, vector<8x8xf32> -> vector<8x8xf32>
    %c0_29 = arith.constant 0 : index
    %c0_30 = arith.constant 0 : index
    %65 = vector.load %arg8[%c0_29, %c0_30] : memref<1x8xf32, #tpu.memory_space<vmem>>, vector<1x8xf32>
    %66 = vector.broadcast %65 : vector<1x8xf32> to vector<8x8xf32>
    %67 = arith.addf %64, %66 : vector<8x8xf32>
    %c0_31 = arith.constant 0 : index
    %c0_32 = arith.constant 0 : index
    %68 = vector.load %arg9[%c0_31, %c0_32] : memref<16x8xbf16, #tpu.memory_space<vmem>>, vector<16x8xbf16>
    %cst_33 = arith.constant dense<0.000000e+00> : vector<8x8xf32>
    %69 = tpu.matmul %19, %68, %cst_33 {dimension_numbers = #tpu.dot_dimension_numbers<[1], [0], [0], [1], [0, 0, 1, 1], [], []>} : vector<8x16xbf16>, vector<16x8xbf16>, vector<8x8xf32> -> vector<8x8xf32>
    %c0_34 = arith.constant 0 : index
    %c0_35 = arith.constant 0 : index
    %70 = vector.load %arg10[%c0_34, %c0_35] : memref<1x8xf32, #tpu.memory_space<vmem>>, vector<1x8xf32>
    %71 = vector.broadcast %70 : vector<1x8xf32> to vector<8x8xf32>
    %72 = arith.addf %69, %71 : vector<8x8xf32>
    %73 = arith.addf %67, %72 : vector<8x8xf32>
    %74 = vector.broadcast %14 : vector<8x1xf32> to vector<8x8xf32>
    %75 = arith.mulf %73, %74 : vector<8x8xf32>
    %76 = vector.broadcast %4 : vector<8x1xf32> to vector<8x8xf32>
    %77 = arith.addf %75, %76 : vector<8x8xf32>
    %c0_36 = arith.constant 0 : index
    %c0_37 = arith.constant 0 : index
    %78 = vector.load %arg11[%c0_36, %c0_37] : memref<8x8xf32, #tpu.memory_space<vmem>>, vector<8x8xf32>
    tpu.vector_store %arg11[%c0_36, %c0_37], %77 {strides = array<i32>} : memref<8x8xf32, #tpu.memory_space<vmem>>, vector<8x8xf32>,
    return
  }
  func.func @transform_0(%arg0: i32) -> (i32, i32) {
    %c0_i32 = arith.constant 0 : i32
    %c0_i32_0 = arith.constant 0 : i32
    return %arg0, %c0_i32 : i32, i32
  }
  func.func @transform_1(%arg0: i32) -> (i32, i32) {
    %c0_i32 = arith.constant 0 : i32
    %c0_i32_0 = arith.constant 0 : i32
    %c0_i32_1 = arith.constant 0 : i32
    return %c0_i32, %c0_i32_0 : i32, i32
  }
  func.func @transform_2(%arg0: i32) -> (i32, i32) {
    %c0_i32 = arith.constant 0 : i32
    %c0_i32_0 = arith.constant 0 : i32
    %c0_i32_1 = arith.constant 0 : i32
    return %c0_i32, %c0_i32_0 : i32, i32
  }
  func.func @transform_3(%arg0: i32) -> (i32, i32) {
    %c0_i32 = arith.constant 0 : i32
    %c0_i32_0 = arith.constant 0 : i32
    %c0_i32_1 = arith.constant 0 : i32
    return %c0_i32, %c0_i32_0 : i32, i32
  }
  func.func @transform_4(%arg0: i32) -> (i32, i32) {
    %c0_i32 = arith.constant 0 : i32
    %c0_i32_0 = arith.constant 0 : i32
    %c0_i32_1 = arith.constant 0 : i32
    return %c0_i32, %c0_i32_0 : i32, i32
  }
  func.func @transform_5(%arg0: i32) -> (i32, i32) {
    %c0_i32 = arith.constant 0 : i32
    %c0_i32_0 = arith.constant 0 : i32
    %c0_i32_1 = arith.constant 0 : i32
    return %c0_i32, %c0_i32_0 : i32, i32
  }
  func.func @transform_6(%arg0: i32) -> (i32, i32) {
    %c0_i32 = arith.constant 0 : i32
    %c0_i32_0 = arith.constant 0 : i32
    %c0_i32_1 = arith.constant 0 : i32
    return %c0_i32, %c0_i32_0 : i32, i32
  }
  func.func @transform_7(%arg0: i32) -> (i32, i32) {
    %c0_i32 = arith.constant 0 : i32
    %c0_i32_0 = arith.constant 0 : i32
    %c0_i32_1 = arith.constant 0 : i32
    return %c0_i32, %c0_i32_0 : i32, i32
  }
  func.func @transform_8(%arg0: i32) -> (i32, i32) {
    %c0_i32 = arith.constant 0 : i32
    %c0_i32_0 = arith.constant 0 : i32
    %c0_i32_1 = arith.constant 0 : i32
    return %c0_i32, %c0_i32_0 : i32, i32
  }
  func.func @transform_9(%arg0: i32) -> (i32, i32) {
    %c0_i32 = arith.constant 0 : i32
    %c0_i32_0 = arith.constant 0 : i32
    %c0_i32_1 = arith.constant 0 : i32
    return %c0_i32, %c0_i32_0 : i32, i32
  }
  func.func @transform_10(%arg0: i32) -> (i32, i32) {
    %c0_i32 = arith.constant 0 : i32
    %c0_i32_0 = arith.constant 0 : i32
    return %arg0, %c0_i32 : i32, i32
  }
}

</mosaic_0001>

<llo_original>
// kernel: tpu_custom_call.1
$region0: #{tpu_custom_call.1}
  #allocation0 [shape = 'u32[]', space=smem, size = 0x4, offset = 0x4, fixed_abs, tag = 'smem constant byte address 0x4 - core index']
  #allocation1 [shape = 'u32[72,128]{1,0:T(1,128)}', space=vmem, size = 0x9000, scoped, tag = 'internal scratch']
  %s0 = inlined_call_operand.vmem [shape: f32[8,16], index: 0, kind: input, shape index: {}]
  %s1 = inlined_call_operand.vmem [shape: bf16[16,512], index: 1, kind: input, shape index: {}]
  %s2 = inlined_call_operand.vmem [shape: f32[1,512], index: 2, kind: input, shape index: {}]
  %s3 = inlined_call_operand.hbm [shape: s8[512,512], index: 3, kind: input, shape index: {}]
  %s4 = inlined_call_operand.vmem [shape: f32[1,512], index: 4, kind: input, shape index: {}]
  %s5 = inlined_call_operand.vmem [shape: f32[1,512], index: 5, kind: input, shape index: {}]
  %s6 = inlined_call_operand.vmem [shape: bf16[512,8], index: 6, kind: input, shape index: {}]
  %s7 = inlined_call_operand.vmem [shape: f32[1,8], index: 7, kind: input, shape index: {}]
  %s8 = inlined_call_operand.vmem [shape: bf16[16,8], index: 8, kind: input, shape index: {}]
  %s9 = inlined_call_operand.vmem [shape: f32[1,8], index: 9, kind: input, shape index: {}]
  %s10 = inlined_call_operand.hbm [shape: f32[8,8], index: 10, kind: output, shape index: {}]
  %s11 = sld [smem:[#allocation0]]
  $region54: #{tpu_custom_call.1} parent=0
    _
  %s13 = ssub.s32 1, %s11
  %s14 = scalar_select 0, %s13, %s11
  $region1: #{tpu_custom_call.1} parent=0
    #allocation2 [shape = 'u8[262144]{0}', space=vmem, size = 0x40000, scoped, tag = 'input window, operand 3, single buffered']
    #allocation3 [shape = 's32[1]{0}', space=sflag, size = 0x4, scoped, tag = 'scoped memory for tpu_custom_call.1']
    #allocation4 [shape = 's32[1]{0}', space=sflag, size = 0x4, scoped, tag = 'scoped memory for tpu_custom_call.1']
    #allocation5 [shape = 'u8[4096]{0}', space=vmem, size = 0x1000, scoped, tag = 'output window, operand 0, single buffered']
    %15 = vsyncpa [#allocation3], 0
    %16 = vsyncpa [#allocation4], 0
    // Predicated region
    $region2: #{tpu_custom_call.1} parent=1 // pred_check
      _
    $region3: #{tpu_custom_call.1} parent=1 // pred_check_branch
      %18 = sbr.rel (0) target = $region5
    $region4: #{tpu_custom_call.1} parent=1 // pred_region
      _
    $region5: #{tpu_custom_call.1} parent=1 // pred_fallthru
      _
    // Predicated region
    $region6: #{tpu_custom_call.1} parent=1 // pred_check
      _
    $region7: #{tpu_custom_call.1} parent=1 // pred_check_branch
      %20 = sbr.rel (0) target = $region9
    $region8: #{tpu_custom_call.1} parent=1 // pred_region
      _
    $region9: #{tpu_custom_call.1} parent=1 // pred_fallthru
      _
    // Predicated region
    $region10: #{tpu_custom_call.1} parent=1 // pred_check
      _
    $region11: #{tpu_custom_call.1} parent=1 // pred_check_branch
      %22 = sbr.rel (0) target = $region13
    $region12: #{tpu_custom_call.1} parent=1 // pred_region
      _
    $region13: #{tpu_custom_call.1} parent=1 // pred_fallthru
      _
    // Predicated region
    $region14: #{tpu_custom_call.1} parent=1 // pred_check
      _
    $region15: #{tpu_custom_call.1} parent=1 // pred_check_branch
      %24 = sbr.rel (0) target = $region17
    $region16: #{tpu_custom_call.1} parent=1 // pred_region
      %26 = vsyncadd [#allocation3], 0
      %s27 = sshll.u32 %s3, 4
      %s28 = int_to_ptr.hbm [resolvable:$true] %s27
      %s29 = sshll.u32 [#allocation2], 4
      %s30 = int_to_ptr.vmem [resolvable:$true] %s29
      %35 = dma.hbm_to_vmem [thread:$0]  %s28, 8192, %s30, [#allocation3], 512, 512, 32
    $region17: #{tpu_custom_call.1} parent=1 // pred_fallthru
      _
    // Predicated region
    $region18: #{tpu_custom_call.1} parent=1 // pred_check
      _
    $region19: #{tpu_custom_call.1} parent=1 // pred_check_branch
      %37 = sbr.rel (0) target = $region21
    $region20: #{tpu_custom_call.1} parent=1 // pred_region
      _
    $region21: #{tpu_custom_call.1} parent=1 // pred_fallthru
      _
    // Predicated region
    $region22: #{tpu_custom_call.1} parent=1 // pred_check
      _
    $region23: #{tpu_custom_call.1} parent=1 // pred_check_branch
      %39 = sbr.rel (0) target = $region25
    $region24: #{tpu_custom_call.1} parent=1 // pred_region
      _
    $region25: #{tpu_custom_call.1} parent=1 // pred_fallthru
      _
    // Predicated region
    $region26: #{tpu_custom_call.1} parent=1 // pred_check
      _
    $region27: #{tpu_custom_call.1} parent=1 // pred_check_branch
      %41 = sbr.rel (0) target = $region29
    $region28: #{tpu_custom_call.1} parent=1 // pred_region
      _
    $region29: #{tpu_custom_call.1} parent=1 // pred_fallthru
      _
    // Predicated region
    $region30: #{tpu_custom_call.1} parent=1 // pred_check
      _
    $region31: #{tpu_custom_call.1} parent=1 // pred_check_branch
      %43 = sbr.rel (0) target = $region33
    $region32: #{tpu_custom_call.1} parent=1 // pred_region
      _
    $region33: #{tpu_custom_call.1} parent=1 // pred_fallthru
      _
    // Predicated region
    $region34: #{tpu_custom_call.1} parent=1 // pred_check
      _
    $region35: #{tpu_custom_call.1} parent=1 // pred_check_branch
      %45 = sbr.rel (0) target = $region37
    $region36: #{tpu_custom_call.1} parent=1 // pred_region
      _
    $region37: #{tpu_custom_call.1} parent=1 // pred_fallthru
      _
    // Predicated region
    $region38: #{tpu_custom_call.1} parent=1 // pred_check
      _
    $region39: #{tpu_custom_call.1} parent=1 // pred_check_branch
      %47 = sbr.rel (0) target = $region41
    $region40: #{tpu_custom_call.1} parent=1 // pred_region
      _
    $region41: #{tpu_custom_call.1} parent=1 // pred_fallthru
      _
    // Predicated region
    $region42: #{tpu_custom_call.1} parent=1 // pred_check
      _
    $region43: #{tpu_custom_call.1} parent=1 // pred_check_branch
      %49 = sbr.rel (0) target = $region45
    $region44: #{tpu_custom_call.1} parent=1 // pred_region
      %51 = dma.done [#allocation3], 8192
    $region45: #{tpu_custom_call.1} parent=1 // pred_fallthru
      _
    %v53 = vld [vmem:[%s0] sm:$0xff]
    %vm54 = vcmask 130048
    %v55 = vsel %vm54, %v53, 0.0
    %56 = vadd.xlane.f32.xlu0 %v55
    %v57 = vpop.xlane.xlu0 %56
    %v58 = vrcp.pop 16.0
    %v59 = vmul.f32 16.0, %v58
    %v60 = vsub.f32 1.0, %v59
    %v61 = vmul.f32 %v58, %v60
    %v62 = vadd.f32 %v58, %v61
    %vm63 = vweird.f32 %v58
    %v64 = vsel %vm63, %v58, %v62
    %v65 = vmul.f32 %v57, %v64
    %v66 = vsub.f32 %v53, %v65
    %v67 = vmul.f32 %v66, %v66
    %v68 = vsel %vm54, %v67, 0.0
    %69 = vadd.xlane.f32.xlu0 %v68
    %v70 = vpop.xlane.xlu0 %69
    %v71 = vmul.f32 %v70, %v64
    %v72 = vadd.f32 %v71, 1e-05
    %v73 = vrsqrt.pop %v72
    %v74 = vmul.f32 %v73, %v72
    %v75 = vmul.f32 %v74, %v73
    %v76 = vmul.f32 0.5, %v75
    %v77 = vsub.f32 1.5, %v76
    %v78 = vmul.f32 %v73, %v77
    %v79 = vmul.f32 %v72, %v78
    %vm80 = vcmp.eq.f32.partialorder %v72, inf
    %v81 = vsel %vm80, %v72, %v79
    %vm82 = vcmp.eq.f32.partialorder %v72, 0.0
    %v83 = vand.u32 %v72, 2147483648
    %v84 = vsel %vm82, %v83, %v81
    %v85 = vrcp.pop %v84
    %v86 = vmul.f32 %v84, %v85
    %v87 = vsub.f32 1.0, %v86
    %v88 = vmul.f32 %v85, %v87
    %v89 = vadd.f32 %v85, %v88
    %vm90 = vweird.f32 %v84
    %vm91 = vweird.f32 %v85
    %vm92 = vmor %vm90, %vm91
    %v93 = vsel %vm92, %v85, %v89
    %v94 = vand.u32 2147483647, %v84
    %vm95 = vcmp.eq.f32.partialorder %v94, 8.507059e+37
    %v96 = vand.u32 %v84, 2147483648
    %v97 = vor.u32 1.1754944e-38, %v96
    %v98 = vsel %vm95, %v97, %v93
    %v99 = vmul.f32 1.0, %v98
    %v100 = vmul.f32 %v66, %v99
    %v101 = vpack.c.bf16 %v100, %v100
    %v102 = vld [vmem:[%s1] sm:$0xff]
    %v103 = vld [vmem:[%s1 + $0x8] sm:$0xff]
    %v104 = vld [vmem:[%s1 + $0x10] sm:$0xff]
    %v105 = vld [vmem:[%s1 + $0x18] sm:$0xff]
    %v106 = vld [vmem:[%s2] sm:$0xf]
    %v108 = vperm.slane %v106, 0
    %v109 = vperm.slane %v106, 1
    %v110 = vperm.slane %v106, 2
    %v111 = vperm.slane %v106, 3
    %v120 = vunpack.c.l.b16 %v102
    %v121 = vunpack.c.h.b16 %v102
    %v122 = vunpack.c.l.b16 %v103
    %v123 = vunpack.c.h.b16 %v103
    %v124 = vunpack.c.l.b16 %v104
    %v125 = vunpack.c.h.b16 %v104
    %v126 = vunpack.c.l.b16 %v105
    %v127 = vunpack.c.h.b16 %v105
    %v128 = vpack.c.b16 %v124, %v120
    %v129 = vpack.c.b16 %v125, %v121
    %v130 = vpack.c.b16 %v126, %v122
    %v131 = vpack.c.b16 %v127, %v123
    %v137 = vsel %vm54, %v101, 0
    %139 = vmatpush.bf16.msra.mxu0 0
    %140 = vmatpush.bf16.msra.mxu0 0
    %141 = vmatpush.bf16.msra.mxu0 0
    %142 = vmatpush.bf16.msra.mxu0 0
    %143 = vmatpush.bf16.msra.mxu0 0
    %144 = vmatpush.bf16.msra.mxu0 0
    %145 = vmatpush.bf16.msra.mxu0 0
    %146 = vmatpush.bf16.msra.mxu0 %v128
    %147 = vmatmul.bf16.gmra.mxu0 %v137
    %v148 = vpop.f32.mrf.mxu0
    %v149 = vadd.f32 %v108, %v148
    %v150 = vpop.f32.mrf.mxu0
    %151 = vdwg.mxu0
    %152 = vmatpush.bf16.msra.mxu0 0
    %153 = vmatpush.bf16.msra.mxu0 0
    %154 = vmatpush.bf16.msra.mxu0 0
    %155 = vmatpush.bf16.msra.mxu0 0
    %156 = vmatpush.bf16.msra.mxu0 0
    %157 = vmatpush.bf16.msra.mxu0 0
    %158 = vmatpush.bf16.msra.mxu0 0
    %159 = vmatpush.bf16.msra.mxu0 %v129
    %160 = vmatmul.bf16.gmra.mxu0 %v137
    %v161 = vpop.f32.mrf.mxu0
    %v162 = vadd.f32 %v109, %v161
    %v163 = vpop.f32.mrf.mxu0
    %164 = vdwg.mxu0
    %165 = vmatpush.bf16.msra.mxu0 0
    %166 = vmatpush.bf16.msra.mxu0 0
    %167 = vmatpush.bf16.msra.mxu0 0
    %168 = vmatpush.bf16.msra.mxu0 0
    %169 = vmatpush.bf16.msra.mxu0 0
    %170 = vmatpush.bf16.msra.mxu0 0
    %171 = vmatpush.bf16.msra.mxu0 0
    %172 = vmatpush.bf16.msra.mxu0 %v130
    %173 = vmatmul.bf16.gmra.mxu0 %v137
    %v174 = vpop.f32.mrf.mxu0
    %v175 = vadd.f32 %v110, %v174
    %v176 = vpop.f32.mrf.mxu0
    %177 = vdwg.mxu0
    %178 = vmatpush.bf16.msra.mxu0 0
    %179 = vmatpush.bf16.msra.mxu0 0
    %180 = vmatpush.bf16.msra.mxu0 0
    %181 = vmatpush.bf16.msra.mxu0 0
    %182 = vmatpush.bf16.msra.mxu0 0
    %183 = vmatpush.bf16.msra.mxu0 0
    %184 = vmatpush.bf16.msra.mxu0 0
    %185 = vmatpush.bf16.msra.mxu0 %v131
    %186 = vmatmul.bf16.gmra.mxu0 %v137
    %v187 = vpop.f32.mrf.mxu0
    %v188 = vadd.f32 %v111, %v187
    %v189 = vpop.f32.mrf.mxu0
    %190 = vdwg.mxu0
    %v191 = vmul.f32 %v149, 0.5
    %v192 = vmul.f32 %v162, 0.5
    %v193 = vmul.f32 %v175, 0.5
    %v194 = vmul.f32 %v188, 0.5
    %v195 = vmul.f32 %v149, 0.044715
    %v196 = vmul.f32 %v162, 0.044715
    %v197 = vmul.f32 %v175, 0.044715
    %v198 = vmul.f32 %v188, 0.044715
    %v199 = vmul.f32 %v195, %v149
    %v200 = vmul.f32 %v196, %v162
    %v201 = vmul.f32 %v197, %v175
    %v202 = vmul.f32 %v198, %v188
    %v203 = vmul.f32 %v199, %v149
    %v204 = vmul.f32 %v200, %v162
    %v205 = vmul.f32 %v201, %v175
    %v206 = vmul.f32 %v202, %v188
    %v207 = vadd.f32 %v149, %v203
    %v208 = vadd.f32 %v162, %v204
    %v209 = vadd.f32 %v175, %v205
    %v210 = vadd.f32 %v188, %v206
    %v211 = vmul.f32 %v207, 0.7978846
    %v212 = vmul.f32 %v208, 0.7978846
    %v213 = vmul.f32 %v209, 0.7978846
    %v214 = vmul.f32 %v210, 0.7978846
    %v215 = vtanh.pop %v211
    %v216 = vtanh.pop %v212
    %v217 = vtanh.pop %v213
    %v218 = vtanh.pop %v214
    %v219 = vadd.f32 %v215, 1.0
    %v220 = vadd.f32 %v216, 1.0
    %v221 = vadd.f32 %v217, 1.0
    %v222 = vadd.f32 %v218, 1.0
    %v223 = vmul.f32 %v191, %v219
    %v224 = vmul.f32 %v192, %v220
    %v225 = vmul.f32 %v193, %v221
    %v226 = vmul.f32 %v194, %v222
    %v227 = vpack.c.bf16 %v223, %v223
    %v228 = vpack.c.bf16 %v224, %v224
    %v229 = vpack.c.bf16 %v225, %v225
    %v230 = vpack.c.bf16 %v226, %v226
    %v231 = vld [vmem:[#allocation2] sm:$0xff]
    %v232 = vld [vmem:[#allocation2 + $0x8] sm:$0xff]
    %v233 = vld [vmem:[#allocation2 + $0x10] sm:$0xff]
    %v234 = vld [vmem:[#allocation2 + $0x18] sm:$0xff]
    %v235 = vld [vmem:[#allocation2 + $0x20] sm:$0xff]
    %v236 = vld [vmem:[#allocation2 + $0x28] sm:$0xff]
    %v237 = vld [vmem:[#allocation2 + $0x30] sm:$0xff]
    %v238 = vld [vmem:[#allocation2 + $0x38] sm:$0xff]
    %v239 = vld [vmem:[#allocation2 + $0x40] sm:$0xff]
    %v240 = vld [vmem:[#allocation2 + $0x48] sm:$0xff]
    %v241 = vld [vmem:[#allocation2 + $0x50] sm:$0xff]
    %v242 = vld [vmem:[#allocation2 + $0x58] sm:$0xff]
    %v243 = vld [vmem:[#allocation2 + $0x60] sm:$0xff]
    %v244 = vld [vmem:[#allocation2 + $0x68] sm:$0xff]
    %v245 = vld [vmem:[#allocation2 + $0x70] sm:$0xff]
    %v246 = vld [vmem:[#allocation2 + $0x78] sm:$0xff]
    %v247 = vld [vmem:[#allocation2 + $0x80] sm:$0xff]
    %v248 = vld [vmem:[#allocation2 + $0x88] sm:$0xff]
    %v249 = vld [vmem:[#allocation2 + $0x90] sm:$0xff]
    %v250 = vld [vmem:[#allocation2 + $0x98] sm:$0xff]
    %v251 = vld [vmem:[#allocation2 + $0xa0] sm:$0xff]
    %v252 = vld [vmem:[#allocation2 + $0xa8] sm:$0xff]
    %v253 = vld [vmem:[#allocation2 + $0xb0] sm:$0xff]
    %v254 = vld [vmem:[#allocation2 + $0xb8] sm:$0xff]
    %v255 = vld [vmem:[#allocation2 + $0xc0] sm:$0xff]
    %v256 = vld [vmem:[#allocation2 + $0xc8] sm:$0xff]
    %v257 = vld [vmem:[#allocation2 + $0xd0] sm:$0xff]
    %v258 = vld [vmem:[#allocation2 + $0xd8] sm:$0xff]
    %v259 = vld [vmem:[#allocation2 + $0xe0] sm:$0xff]
    %v260 = vld [vmem:[#allocation2 + $0xe8] sm:$0xff]
    %v261 = vld [vmem:[#allocation2 + $0xf0] sm:$0xff]
    %v262 = vld [vmem:[#allocation2 + $0xf8] sm:$0xff]
    %v263 = vld [vmem:[#allocation2 + $0x100] sm:$0xff]
    %v264 = vld [vmem:[#allocation2 + $0x108] sm:$0xff]
    %v265 = vld [vmem:[#allocation2 + $0x110] sm:$0xff]
    %v266 = vld [vmem:[#allocation2 + $0x118] sm:$0xff]
    %v267 = vld [vmem:[#allocation2 + $0x120] sm:$0xff]
    %v268 = vld [vmem:[#allocation2 + $0x128] sm:$0xff]
    %v269 = vld [vmem:[#allocation2 + $0x130] sm:$0xff]
    %v270 = vld [vmem:[#allocation2 + $0x138] sm:$0xff]
    %v271 = vld [vmem:[#allocation2 + $0x140] sm:$0xff]
    %v272 = vld [vmem:[#allocation2 + $0x148] sm:$0xff]
    %v273 = vld [vmem:[#allocation2 + $0x150] sm:$0xff]
    %v274 = vld [vmem:[#allocation2 + $0x158] sm:$0xff]
    %v275 = vld [vmem:[#allocation2 + $0x160] sm:$0xff]
    %v276 = vld [vmem:[#allocation2 + $0x168] sm:$0xff]
    %v277 = vld [vmem:[#allocation2 + $0x170] sm:$0xff]
    %v278 = vld [vmem:[#allocation2 + $0x178] sm:$0xff]
    %v279 = vld [vmem:[#allocation2 + $0x180] sm:$0xff]
    %v280 = vld [vmem:[#allocation2 + $0x188] sm:$0xff]
    %v281 = vld [vmem:[#allocation2 + $0x190] sm:$0xff]
    %v282 = vld [vmem:[#allocation2 + $0x198] sm:$0xff]
    %v283 = vld [vmem:[#allocation2 + $0x1a0] sm:$0xff]
    %v284 = vld [vmem:[#allocation2 + $0x1a8] sm:$0xff]
    %v285 = vld [vmem:[#allocation2 + $0x1b0] sm:$0xff]
    %v286 = vld [vmem:[#allocation2 + $0x1b8] sm:$0xff]
    %v287 = vld [vmem:[#allocation2 + $0x1c0] sm:$0xff]
    %v288 = vld [vmem:[#allocation2 + $0x1c8] sm:$0xff]
    %v289 = vld [vmem:[#allocation2 + $0x1d0] sm:$0xff]
    %v290 = vld [vmem:[#allocation2 + $0x1d8] sm:$0xff]
    %v291 = vld [vmem:[#allocation2 + $0x1e0] sm:$0xff]
    %v292 = vld [vmem:[#allocation2 + $0x1e8] sm:$0xff]
    %v293 = vld [vmem:[#allocation2 + $0x1f0] sm:$0xff]
    %v294 = vld [vmem:[#allocation2 + $0x1f8] sm:$0xff]
    %v295 = vunpack.c.0.s8 %v231
    %v296 = vunpack.c.0.s8 %v232
    %v297 = vunpack.c.0.s8 %v233
    %v298 = vunpack.c.0.s8 %v234
    %v299 = vunpack.c.1.s8 %v231
    %v300 = vunpack.c.1.s8 %v232
    %v301 = vunpack.c.1.s8 %v233
    %v302 = vunpack.c.1.s8 %v234
    %v303 = vunpack.c.2.s8 %v231
    %v304 = vunpack.c.2.s8 %v232
    %v305 = vunpack.c.2.s8 %v233
    %v306 = vunpack.c.2.s8 %v234
    %v307 = vunpack.c.3.s8 %v231
    %v308 = vunpack.c.3.s8 %v232
    %v309 = vunpack.c.3.s8 %v233
    %v310 = vunpack.c.3.s8 %v234
    %v311 = vunpack.c.0.s8 %v235
    %v312 = vunpack.c.0.s8 %v236
    %v313 = vunpack.c.0.s8 %v237
    %v314 = vunpack.c.0.s8 %v238
    %v315 = vunpack.c.1.s8 %v235
    %v316 = vunpack.c.1.s8 %v236
    %v317 = vunpack.c.1.s8 %v237
    %v318 = vunpack.c.1.s8 %v238
    %v319 = vunpack.c.2.s8 %v235
    %v320 = vunpack.c.2.s8 %v236
    %v321 = vunpack.c.2.s8 %v237
    %v322 = vunpack.c.2.s8 %v238
    %v323 = vunpack.c.3.s8 %v235
    %v324 = vunpack.c.3.s8 %v236
    %v325 = vunpack.c.3.s8 %v237
    %v326 = vunpack.c.3.s8 %v238
    %v327 = vunpack.c.0.s8 %v239
    %v328 = vunpack.c.0.s8 %v240
    %v329 = vunpack.c.0.s8 %v241
    %v330 = vunpack.c.0.s8 %v242
    %v331 = vunpack.c.1.s8 %v239
    %v332 = vunpack.c.1.s8 %v240
    %v333 = vunpack.c.1.s8 %v241
    %v334 = vunpack.c.1.s8 %v242
    %v335 = vunpack.c.2.s8 %v239
    %v336 = vunpack.c.2.s8 %v240
    %v337 = vunpack.c.2.s8 %v241
    %v338 = vunpack.c.2.s8 %v242
    %v339 = vunpack.c.3.s8 %v239
    %v340 = vunpack.c.3.s8 %v240
    %v341 = vunpack.c.3.s8 %v241
    %v342 = vunpack.c.3.s8 %v242
    %v343 = vunpack.c.0.s8 %v243
    %v344 = vunpack.c.0.s8 %v244
    %v345 = vunpack.c.0.s8 %v245
    %v346 = vunpack.c.0.s8 %v246
    %v347 = vunpack.c.1.s8 %v243
    %v348 = vunpack.c.1.s8 %v244
    %v349 = vunpack.c.1.s8 %v245
    %v350 = vunpack.c.1.s8 %v246
    %v351 = vunpack.c.2.s8 %v243
    %v352 = vunpack.c.2.s8 %v244
    %v353 = vunpack.c.2.s8 %v245
    %v354 = vunpack.c.2.s8 %v246
    %v355 = vunpack.c.3.s8 %v243
    %v356 = vunpack.c.3.s8 %v244
    %v357 = vunpack.c.3.s8 %v245
    %v358 = vunpack.c.3.s8 %v246
    %v359 = vunpack.c.0.s8 %v247
    %v360 = vunpack.c.0.s8 %v248
    %v361 = vunpack.c.0.s8 %v249
    %v362 = vunpack.c.0.s8 %v250
    %v363 = vunpack.c.1.s8 %v247
    %v364 = vunpack.c.1.s8 %v248
    %v365 = vunpack.c.1.s8 %v249
    %v366 = vunpack.c.1.s8 %v250
    %v367 = vunpack.c.2.s8 %v247
    %v368 = vunpack.c.2.s8 %v248
    %v369 = vunpack.c.2.s8 %v249
    %v370 = vunpack.c.2.s8 %v250
    %v371 = vunpack.c.3.s8 %v247
    %v372 = vunpack.c.3.s8 %v248
    %v373 = vunpack.c.3.s8 %v249
    %v374 = vunpack.c.3.s8 %v250
    %v375 = vunpack.c.0.s8 %v251
    %v376 = vunpack.c.0.s8 %v252
    %v377 = vunpack.c.0.s8 %v253
    %v378 = vunpack.c.0.s8 %v254
    %v379 = vunpack.c.1.s8 %v251
    %v380 = vunpack.c.1.s8 %v252
    %v381 = vunpack.c.1.s8 %v253
    %v382 = vunpack.c.1.s8 %v254
    %v383 = vunpack.c.2.s8 %v251
    %v384 = vunpack.c.2.s8 %v252
    %v385 = vunpack.c.2.s8 %v253
    %v386 = vunpack.c.2.s8 %v254
    %v387 = vunpack.c.3.s8 %v251
    %v388 = vunpack.c.3.s8 %v252
    %v389 = vunpack.c.3.s8 %v253
    %v390 = vunpack.c.3.s8 %v254
    %v391 = vunpack.c.0.s8 %v255
    %v392 = vunpack.c.0.s8 %v256
    %v393 = vunpack.c.0.s8 %v257
    %v394 = vunpack.c.0.s8 %v258
    %v395 = vunpack.c.1.s8 %v255
    %v396 = vunpack.c.1.s8 %v256
    %v397 = vunpack.c.1.s8 %v257
    %v398 = vunpack.c.1.s8 %v258
    %v399 = vunpack.c.2.s8 %v255
    %v400 = vunpack.c.2.s8 %v256
    %v401 = vunpack.c.2.s8 %v257
    %v402 = vunpack.c.2.s8 %v258
    %v403 = vunpack.c.3.s8 %v255
    %v404 = vunpack.c.3.s8 %v256
    %v405 = vunpack.c.3.s8 %v257
    %v406 = vunpack.c.3.s8 %v258
    %v407 = vunpack.c.0.s8 %v259
    %v408 = vunpack.c.0.s8 %v260
    %v409 = vunpack.c.0.s8 %v261
    %v410 = vunpack.c.0.s8 %v262
    %v411 = vunpack.c.1.s8 %v259
    %v412 = vunpack.c.1.s8 %v260
    %v413 = vunpack.c.1.s8 %v261
    %v414 = vunpack.c.1.s8 %v262
    %v415 = vunpack.c.2.s8 %v259
    %v416 = vunpack.c.2.s8 %v260
    %v417 = vunpack.c.2.s8 %v261
    %v418 = vunpack.c.2.s8 %v262
    %v419 = vunpack.c.3.s8 %v259
    %v420 = vunpack.c.3.s8 %v260
    %v421 = vunpack.c.3.s8 %v261
    %v422 = vunpack.c.3.s8 %v262
    %v423 = vunpack.c.0.s8 %v263
    %v424 = vunpack.c.0.s8 %v264
    %v425 = vunpack.c.0.s8 %v265
    %v426 = vunpack.c.0.s8 %v266
    %v427 = vunpack.c.1.s8 %v263
    %v428 = vunpack.c.1.s8 %v264
    %v429 = vunpack.c.1.s8 %v265
    %v430 = vunpack.c.1.s8 %v266
    %v431 = vunpack.c.2.s8 %v263
    %v432 = vunpack.c.2.s8 %v264
    %v433 = vunpack.c.2.s8 %v265
    %v434 = vunpack.c.2.s8 %v266
    %v435 = vunpack.c.3.s8 %v263
    %v436 = vunpack.c.3.s8 %v264
    %v437 = vunpack.c.3.s8 %v265
    %v438 = vunpack.c.3.s8 %v266
    %v439 = vunpack.c.0.s8 %v267
    %v440 = vunpack.c.0.s8 %v268
    %v441 = vunpack.c.0.s8 %v269
    %v442 = vunpack.c.0.s8 %v270
    %v443 = vunpack.c.1.s8 %v267
    %v444 = vunpack.c.1.s8 %v268
    %v445 = vunpack.c.1.s8 %v269
    %v446 = vunpack.c.1.s8 %v270
    %v447 = vunpack.c.2.s8 %v267
    %v448 = vunpack.c.2.s8 %v268
    %v449 = vunpack.c.2.s8 %v269
    %v450 = vunpack.c.2.s8 %v270
    %v451 = vunpack.c.3.s8 %v267
    %v452 = vunpack.c.3.s8 %v268
    %v453 = vunpack.c.3.s8 %v269
    %v454 = vunpack.c.3.s8 %v270
    %v455 = vunpack.c.0.s8 %v271
    %v456 = vunpack.c.0.s8 %v272
    %v457 = vunpack.c.0.s8 %v273
    %v458 = vunpack.c.0.s8 %v274
    %v459 = vunpack.c.1.s8 %v271
    %v460 = vunpack.c.1.s8 %v272
    %v461 = vunpack.c.1.s8 %v273
    %v462 = vunpack.c.1.s8 %v274
    %v463 = vunpack.c.2.s8 %v271
    %v464 = vunpack.c.2.s8 %v272
    %v465 = vunpack.c.2.s8 %v273
    %v466 = vunpack.c.2.s8 %v274
    %v467 = vunpack.c.3.s8 %v271
    %v468 = vunpack.c.3.s8 %v272
    %v469 = vunpack.c.3.s8 %v273
    %v470 = vunpack.c.3.s8 %v274
    %v471 = vunpack.c.0.s8 %v275
    %v472 = vunpack.c.0.s8 %v276
    %v473 = vunpack.c.0.s8 %v277
    %v474 = vunpack.c.0.s8 %v278
    %v475 = vunpack.c.1.s8 %v275
    %v476 = vunpack.c.1.s8 %v276
    %v477 = vunpack.c.1.s8 %v277
    %v478 = vunpack.c.1.s8 %v278
    %v479 = vunpack.c.2.s8 %v275
    %v480 = vunpack.c.2.s8 %v276
    %v481 = vunpack.c.2.s8 %v277
    %v482 = vunpack.c.2.s8 %v278
    %v483 = vunpack.c.3.s8 %v275
    %v484 = vunpack.c.3.s8 %v276
    %v485 = vunpack.c.3.s8 %v277
    %v486 = vunpack.c.3.s8 %v278
    %v487 = vunpack.c.0.s8 %v279
    %v488 = vunpack.c.0.s8 %v280
    %v489 = vunpack.c.0.s8 %v281
    %v490 = vunpack.c.0.s8 %v282
    %v491 = vunpack.c.1.s8 %v279
    %v492 = vunpack.c.1.s8 %v280
    %v493 = vunpack.c.1.s8 %v281
    %v494 = vunpack.c.1.s8 %v282
    %v495 = vunpack.c.2.s8 %v279
    %v496 = vunpack.c.2.s8 %v280
    %v497 = vunpack.c.2.s8 %v281
    %v498 = vunpack.c.2.s8 %v282
    %v499 = vunpack.c.3.s8 %v279
    %v500 = vunpack.c.3.s8 %v280
    %v501 = vunpack.c.3.s8 %v281
    %v502 = vunpack.c.3.s8 %v282
    %v503 = vunpack.c.0.s8 %v283
    %v504 = vunpack.c.0.s8 %v284
    %v505 = vunpack.c.0.s8 %v285
    %v506 = vunpack.c.0.s8 %v286
    %v507 = vunpack.c.1.s8 %v283
    %v508 = vunpack.c.1.s8 %v284
    %v509 = vunpack.c.1.s8 %v285
    %v510 = vunpack.c.1.s8 %v286
    %v511 = vunpack.c.2.s8 %v283
    %v512 = vunpack.c.2.s8 %v284
    %v513 = vunpack.c.2.s8 %v285
    %v514 = vunpack.c.2.s8 %v286
    %v515 = vunpack.c.3.s8 %v283
    %v516 = vunpack.c.3.s8 %v284
    %v517 = vunpack.c.3.s8 %v285
    %v518 = vunpack.c.3.s8 %v286
    %v519 = vunpack.c.0.s8 %v287
    %v520 = vunpack.c.0.s8 %v288
    %v521 = vunpack.c.0.s8 %v289
    %v522 = vunpack.c.0.s8 %v290
    %v523 = vunpack.c.1.s8 %v287
    %v524 = vunpack.c.1.s8 %v288
    %v525 = vunpack.c.1.s8 %v289
    %v526 = vunpack.c.1.s8 %v290
    %v527 = vunpack.c.2.s8 %v287
    %v528 = vunpack.c.2.s8 %v288
    %v529 = vunpack.c.2.s8 %v289
    %v530 = vunpack.c.2.s8 %v290
    %v531 = vunpack.c.3.s8 %v287
    %v532 = vunpack.c.3.s8 %v288
    %v533 = vunpack.c.3.s8 %v289
    %v534 = vunpack.c.3.s8 %v290
    %v535 = vunpack.c.0.s8 %v291
    %v536 = vunpack.c.0.s8 %v292
    %v537 = vunpack.c.0.s8 %v293
    %v538 = vunpack.c.0.s8 %v294
    %v539 = vunpack.c.1.s8 %v291
    %v540 = vunpack.c.1.s8 %v292
    %v541 = vunpack.c.1.s8 %v293
    %v542 = vunpack.c.1.s8 %v294
    %v543 = vunpack.c.2.s8 %v291
    %v544 = vunpack.c.2.s8 %v292
    %v545 = vunpack.c.2.s8 %v293
    %v546 = vunpack.c.2.s8 %v294
    %v547 = vunpack.c.3.s8 %v291
    %v548 = vunpack.c.3.s8 %v292
    %v549 = vunpack.c.3.s8 %v293
    %v550 = vunpack.c.3.s8 %v294
    %v551 = vcvt.s32.f32 %v295
    %v552 = vcvt.s32.f32 %v296
    %v553 = vcvt.s32.f32 %v297
    %v554 = vcvt.s32.f32 %v298
    %v555 = vcvt.s32.f32 %v299
    %v556 = vcvt.s32.f32 %v300
    %v557 = vcvt.s32.f32 %v301
    %v558 = vcvt.s32.f32 %v302
    %v559 = vcvt.s32.f32 %v303
    %v560 = vcvt.s32.f32 %v304
    %v561 = vcvt.s32.f32 %v305
    %v562 = vcvt.s32.f32 %v306
    %v563 = vcvt.s32.f32 %v307
    %v564 = vcvt.s32.f32 %v308
    %v565 = vcvt.s32.f32 %v309
    %v566 = vcvt.s32.f32 %v310
    %v567 = vcvt.s32.f32 %v311
    %v568 = vcvt.s32.f32 %v312
    %v569 = vcvt.s32.f32 %v313
    %v570 = vcvt.s32.f32 %v314
    %v571 = vcvt.s32.f32 %v315
    %v572 = vcvt.s32.f32 %v316
    %v573 = vcvt.s32.f32 %v317
    %v574 = vcvt.s32.f32 %v318
    %v575 = vcvt.s32.f32 %v319
    %v576 = vcvt.s32.f32 %v320
    %v577 = vcvt.s32.f32 %v321
    %v578 = vcvt.s32.f32 %v322
    %v579 = vcvt.s32.f32 %v323
    %v580 = vcvt.s32.f32 %v324
    %v581 = vcvt.s32.f32 %v325
    %v582 = vcvt.s32.f32 %v326
    %v583 = vcvt.s32.f32 %v327
    %v584 = vcvt.s32.f32 %v328
    %v585 = vcvt.s32.f32 %v329
    %v586 = vcvt.s32.f32 %v330
    %v587 = vcvt.s32.f32 %v331
    %v588 = vcvt.s32.f32 %v332
    %v589 = vcvt.s32.f32 %v333
    %v590 = vcvt.s32.f32 %v334
    %v591 = vcvt.s32.f32 %v335
    %v592 = vcvt.s32.f32 %v336
    %v593 = vcvt.s32.f32 %v337
    %v594 = vcvt.s32.f32 %v338
    %v595 = vcvt.s32.f32 %v339
    %v596 = vcvt.s32.f32 %v340
    %v597 = vcvt.s32.f32 %v341
    %v598 = vcvt.s32.f32 %v342
    %v599 = vcvt.s32.f32 %v343
    %v600 = vcvt.s32.f32 %v344
    %v601 = vcvt.s32.f32 %v345
    %v602 = vcvt.s32.f32 %v346
    %v603 = vcvt.s32.f32 %v347
    %v604 = vcvt.s32.f32 %v348
    %v605 = vcvt.s32.f32 %v349
    %v606 = vcvt.s32.f32 %v350
    %v607 = vcvt.s32.f32 %v351
    %v608 = vcvt.s32.f32 %v352
    %v609 = vcvt.s32.f32 %v353
    %v610 = vcvt.s32.f32 %v354
    %v611 = vcvt.s32.f32 %v355
    %v612 = vcvt.s32.f32 %v356
    %v613 = vcvt.s32.f32 %v357
    %v614 = vcvt.s32.f32 %v358
    %v615 = vcvt.s32.f32 %v359
    %v616 = vcvt.s32.f32 %v360
    %v617 = vcvt.s32.f32 %v361
    %v618 = vcvt.s32.f32 %v362
    %v619 = vcvt.s32.f32 %v363
    %v620 = vcvt.s32.f32 %v364
    %v621 = vcvt.s32.f32 %v365
    %v622 = vcvt.s32.f32 %v366
    %v623 = vcvt.s32.f32 %v367
    %v624 = vcvt.s32.f32 %v368
    %v625 = vcvt.s32.f32 %v369
    %v626 = vcvt.s32.f32 %v370
    %v627 = vcvt.s32.f32 %v371
    %v628 = vcvt.s32.f32 %v372
    %v629 = vcvt.s32.f32 %v373
    %v630 = vcvt.s32.f32 %v374
    %v631 = vcvt.s32.f32 %v375
    %v632 = vcvt.s32.f32 %v376
    %v633 = vcvt.s32.f32 %v377
    %v634 = vcvt.s32.f32 %v378
    %v635 = vcvt.s32.f32 %v379
    %v636 = vcvt.s32.f32 %v380
    %v637 = vcvt.s32.f32 %v381
    %v638 = vcvt.s32.f32 %v382
    %v639 = vcvt.s32.f32 %v383
    %v640 = vcvt.s32.f32 %v384
    %v641 = vcvt.s32.f32 %v385
    %v642 = vcvt.s32.f32 %v386
    %v643 = vcvt.s32.f32 %v387
    %v644 = vcvt.s32.f32 %v388
    %v645 = vcvt.s32.f32 %v389
    %v646 = vcvt.s32.f32 %v390
    %v647 = vcvt.s32.f32 %v391
    %v648 = vcvt.s32.f32 %v392
    %v649 = vcvt.s32.f32 %v393
    %v650 = vcvt.s32.f32 %v394
    %v651 = vcvt.s32.f32 %v395
    %v652 = vcvt.s32.f32 %v396
    %v653 = vcvt.s32.f32 %v397
    %v654 = vcvt.s32.f32 %v398
    %v655 = vcvt.s32.f32 %v399
    %v656 = vcvt.s32.f32 %v400
    %v657 = vcvt.s32.f32 %v401
    %v658 = vcvt.s32.f32 %v402
    %v659 = vcvt.s32.f32 %v403
    %v660 = vcvt.s32.f32 %v404
    %v661 = vcvt.s32.f32 %v405
    %v662 = vcvt.s32.f32 %v406
    %v663 = vcvt.s32.f32 %v407
    %v664 = vcvt.s32.f32 %v408
    %v665 = vcvt.s32.f32 %v409
    %v666 = vcvt.s32.f32 %v410
    %v667 = vcvt.s32.f32 %v411
    %v668 = vcvt.s32.f32 %v412
    %v669 = vcvt.s32.f32 %v413
    %v670 = vcvt.s32.f32 %v414
    %v671 = vcvt.s32.f32 %v415
    %v672 = vcvt.s32.f32 %v416
    %v673 = vcvt.s32.f32 %v417
    %v674 = vcvt.s32.f32 %v418
    %v675 = vcvt.s32.f32 %v419
    %v676 = vcvt.s32.f32 %v420
    %v677 = vcvt.s32.f32 %v421
    %v678 = vcvt.s32.f32 %v422
    %v679 = vcvt.s32.f32 %v423
    %v680 = vcvt.s32.f32 %v424
    %v681 = vcvt.s32.f32 %v425
    %v682 = vcvt.s32.f32 %v426
    %v683 = vcvt.s32.f32 %v427
    %v684 = vcvt.s32.f32 %v428
    %v685 = vcvt.s32.f32 %v429
    %v686 = vcvt.s32.f32 %v430
    %v687 = vcvt.s32.f32 %v431
    %v688 = vcvt.s32.f32 %v432
    %v689 = vcvt.s32.f32 %v433
    %v690 = vcvt.s32.f32 %v434
    %v691 = vcvt.s32.f32 %v435
    %v692 = vcvt.s32.f32 %v436
    %v693 = vcvt.s32.f32 %v437
    %v694 = vcvt.s32.f32 %v438
    %v695 = vcvt.s32.f32 %v439
    %v696 = vcvt.s32.f32 %v440
    %v697 = vcvt.s32.f32 %v441
    %v698 = vcvt.s32.f32 %v442
    %v699 = vcvt.s32.f32 %v443
    %v700 = vcvt.s32.f32 %v444
    %v701 = vcvt.s32.f32 %v445
    %v702 = vcvt.s32.f32 %v446
    %v703 = vcvt.s32.f32 %v447
    %v704 = vcvt.s32.f32 %v448
    %v705 = vcvt.s32.f32 %v449
    %v706 = vcvt.s32.f32 %v450
    %v707 = vcvt.s32.f32 %v451
    %v708 = vcvt.s32.f32 %v452
    %v709 = vcvt.s32.f32 %v453
    %v710 = vcvt.s32.f32 %v454
    %v711 = vcvt.s32.f32 %v455
    %v712 = vcvt.s32.f32 %v456
    %v713 = vcvt.s32.f32 %v457
    %v714 = vcvt.s32.f32 %v458
    %v715 = vcvt.s32.f32 %v459
    %v716 = vcvt.s32.f32 %v460
    %v717 = vcvt.s32.f32 %v461
    %v718 = vcvt.s32.f32 %v462
    %v719 = vcvt.s32.f32 %v463
    %v720 = vcvt.s32.f32 %v464
    %v721 = vcvt.s32.f32 %v465
    %v722 = vcvt.s32.f32 %v466
    %v723 = vcvt.s32.f32 %v467
    %v724 = vcvt.s32.f32 %v468
    %v725 = vcvt.s32.f32 %v469
    %v726 = vcvt.s32.f32 %v470
    %v727 = vcvt.s32.f32 %v471
    %v728 = vcvt.s32.f32 %v472
    %v729 = vcvt.s32.f32 %v473
    %v730 = vcvt.s32.f32 %v474
    %v731 = vcvt.s32.f32 %v475
    %v732 = vcvt.s32.f32 %v476
    %v733 = vcvt.s32.f32 %v477
    %v734 = vcvt.s32.f32 %v478
    %v735 = vcvt.s32.f32 %v479
    %v736 = vcvt.s32.f32 %v480
    %v737 = vcvt.s32.f32 %v481
    %v738 = vcvt.s32.f32 %v482
    %v739 = vcvt.s32.f32 %v483
    %v740 = vcvt.s32.f32 %v484
    %v741 = vcvt.s32.f32 %v485
    %v742 = vcvt.s32.f32 %v486
    %v743 = vcvt.s32.f32 %v487
    %v744 = vcvt.s32.f32 %v488
    %v745 = vcvt.s32.f32 %v489
    %v746 = vcvt.s32.f32 %v490
    %v747 = vcvt.s32.f32 %v491
    %v748 = vcvt.s32.f32 %v492
    %v749 = vcvt.s32.f32 %v493
    %v750 = vcvt.s32.f32 %v494
    %v751 = vcvt.s32.f32 %v495
    %v752 = vcvt.s32.f32 %v496
    %v753 = vcvt.s32.f32 %v497
    %v754 = vcvt.s32.f32 %v498
    %v755 = vcvt.s32.f32 %v499
    %v756 = vcvt.s32.f32 %v500
    %v757 = vcvt.s32.f32 %v501
    %v758 = vcvt.s32.f32 %v502
    %v759 = vcvt.s32.f32 %v503
    %v760 = vcvt.s32.f32 %v504
    %v761 = vcvt.s32.f32 %v505
    %v762 = vcvt.s32.f32 %v506
    %v763 = vcvt.s32.f32 %v507
    %v764 = vcvt.s32.f32 %v508
    %v765 = vcvt.s32.f32 %v509
    %v766 = vcvt.s32.f32 %v510
    %v767 = vcvt.s32.f32 %v511
    %v768 = vcvt.s32.f32 %v512
    %v769 = vcvt.s32.f32 %v513
    %v770 = vcvt.s32.f32 %v514
    %v771 = vcvt.s32.f32 %v515
    %v772 = vcvt.s32.f32 %v516
    %v773 = vcvt.s32.f32 %v517
    %v774 = vcvt.s32.f32 %v518
    %v775 = vcvt.s32.f32 %v519
    %v776 = vcvt.s32.f32 %v520
    %v777 = vcvt.s32.f32 %v521
    %v778 = vcvt.s32.f32 %v522
    %v779 = vcvt.s32.f32 %v523
    %v780 = vcvt.s32.f32 %v524
    %v781 = vcvt.s32.f32 %v525
    %v782 = vcvt.s32.f32 %v526
    %v783 = vcvt.s32.f32 %v527
    %v784 = vcvt.s32.f32 %v528
    %v785 = vcvt.s32.f32 %v529
    %v786 = vcvt.s32.f32 %v530
    %v787 = vcvt.s32.f32 %v531
    %v788 = vcvt.s32.f32 %v532
    %v789 = vcvt.s32.f32 %v533
    %v790 = vcvt.s32.f32 %v534
    %v791 = vcvt.s32.f32 %v535
    %v792 = vcvt.s32.f32 %v536
    %v793 = vcvt.s32.f32 %v537
    %v794 = vcvt.s32.f32 %v538
    %v795 = vcvt.s32.f32 %v539
    %v796 = vcvt.s32.f32 %v540
    %v797 = vcvt.s32.f32 %v541
    %v798 = vcvt.s32.f32 %v542
    %v799 = vcvt.s32.f32 %v543
    %v800 = vcvt.s32.f32 %v544
    %v801 = vcvt.s32.f32 %v545
    %v802 = vcvt.s32.f32 %v546
    %v803 = vcvt.s32.f32 %v547
    %v804 = vcvt.s32.f32 %v548
    %v805 = vcvt.s32.f32 %v549
    %v806 = vcvt.s32.f32 %v550
    %v807 = vpack.c.bf16 %v555, %v551
    %v808 = vpack.c.bf16 %v556, %v552
    %v809 = vpack.c.bf16 %v557, %v553
    %v810 = vpack.c.bf16 %v558, %v554
    %v811 = vpack.c.bf16 %v563, %v559
    %v812 = vpack.c.bf16 %v564, %v560
    %v813 = vpack.c.bf16 %v565, %v561
    %v814 = vpack.c.bf16 %v566, %v562
    %v815 = vpack.c.bf16 %v571, %v567
    %v816 = vpack.c.bf16 %v572, %v568
    %v817 = vpack.c.bf16 %v573, %v569
    %v818 = vpack.c.bf16 %v574, %v570
    %v819 = vpack.c.bf16 %v579, %v575
    %v820 = vpack.c.bf16 %v580, %v576
    %v821 = vpack.c.bf16 %v581, %v577
    %v822 = vpack.c.bf16 %v582, %v578
    %v823 = vpack.c.bf16 %v587, %v583
    %v824 = vpack.c.bf16 %v588, %v584
    %v825 = vpack.c.bf16 %v589, %v585
    %v826 = vpack.c.bf16 %v590, %v586
    %v827 = vpack.c.bf16 %v595, %v591
    %v828 = vpack.c.bf16 %v596, %v592
    %v829 = vpack.c.bf16 %v597, %v593
    %v830 = vpack.c.bf16 %v598, %v594
    %v831 = vpack.c.bf16 %v603, %v599
    %v832 = vpack.c.bf16 %v604, %v600
    %v833 = vpack.c.bf16 %v605, %v601
    %v834 = vpack.c.bf16 %v606, %v602
    %v835 = vpack.c.bf16 %v611, %v607
    %v836 = vpack.c.bf16 %v612, %v608
    %v837 = vpack.c.bf16 %v613, %v609
    %v838 = vpack.c.bf16 %v614, %v610
    %v839 = vpack.c.bf16 %v619, %v615
    %v840 = vpack.c.bf16 %v620, %v616
    %v841 = vpack.c.bf16 %v621, %v617
    %v842 = vpack.c.bf16 %v622, %v618
    %v843 = vpack.c.bf16 %v627, %v623
    %v844 = vpack.c.bf16 %v628, %v624
    %v845 = vpack.c.bf16 %v629, %v625
    %v846 = vpack.c.bf16 %v630, %v626
    %v847 = vpack.c.bf16 %v635, %v631
    %v848 = vpack.c.bf16 %v636, %v632
    %v849 = vpack.c.bf16 %v637, %v633
    %v850 = vpack.c.bf16 %v638, %v634
    %v851 = vpack.c.bf16 %v643, %v639
    %v852 = vpack.c.bf16 %v644, %v640
    %v853 = vpack.c.bf16 %v645, %v641
    %v854 = vpack.c.bf16 %v646, %v642
    %v855 = vpack.c.bf16 %v651, %v647
    %v856 = vpack.c.bf16 %v652, %v648
    %v857 = vpack.c.bf16 %v653, %v649
    %v858 = vpack.c.bf16 %v654, %v650
    %v859 = vpack.c.bf16 %v659, %v655
    %v860 = vpack.c.bf16 %v660, %v656
    %v861 = vpack.c.bf16 %v661, %v657
    %v862 = vpack.c.bf16 %v662, %v658
    %v863 = vpack.c.bf16 %v667, %v663
    %v864 = vpack.c.bf16 %v668, %v664
    %v865 = vpack.c.bf16 %v669, %v665
    %v866 = vpack.c.bf16 %v670, %v666
    %v867 = vpack.c.bf16 %v675, %v671
    %v868 = vpack.c.bf16 %v676, %v672
    %v869 = vpack.c.bf16 %v677, %v673
    %v870 = vpack.c.bf16 %v678, %v674
    %v871 = vpack.c.bf16 %v683, %v679
    %v872 = vpack.c.bf16 %v684, %v680
    %v873 = vpack.c.bf16 %v685, %v681
    %v874 = vpack.c.bf16 %v686, %v682
    %v875 = vpack.c.bf16 %v691, %v687
    %v876 = vpack.c.bf16 %v692, %v688
    %v877 = vpack.c.bf16 %v693, %v689
    %v878 = vpack.c.bf16 %v694, %v690
    %v879 = vpack.c.bf16 %v699, %v695
    %v880 = vpack.c.bf16 %v700, %v696
    %v881 = vpack.c.bf16 %v701, %v697
    %v882 = vpack.c.bf16 %v702, %v698
    %v883 = vpack.c.bf16 %v707, %v703
    %v884 = vpack.c.bf16 %v708, %v704
    %v885 = vpack.c.bf16 %v709, %v705
    %v886 = vpack.c.bf16 %v710, %v706
    %v887 = vpack.c.bf16 %v715, %v711
    %v888 = vpack.c.bf16 %v716, %v712
    %v889 = vpack.c.bf16 %v717, %v713
    %v890 = vpack.c.bf16 %v718, %v714
    %v891 = vpack.c.bf16 %v723, %v719
    %v892 = vpack.c.bf16 %v724, %v720
    %v893 = vpack.c.bf16 %v725, %v721
    %v894 = vpack.c.bf16 %v726, %v722
    %v895 = vpack.c.bf16 %v731, %v727
    %v896 = vpack.c.bf16 %v732, %v728
    %v897 = vpack.c.bf16 %v733, %v729
    %v898 = vpack.c.bf16 %v734, %v730
    %v899 = vpack.c.bf16 %v739, %v735
    %v900 = vpack.c.bf16 %v740, %v736
    %v901 = vpack.c.bf16 %v741, %v737
    %v902 = vpack.c.bf16 %v742, %v738
    %v903 = vpack.c.bf16 %v747, %v743
    %v904 = vpack.c.bf16 %v748, %v744
    %v905 = vpack.c.bf16 %v749, %v745
    %v906 = vpack.c.bf16 %v750, %v746
    %v907 = vpack.c.bf16 %v755, %v751
    %v908 = vpack.c.bf16 %v756, %v752
    %v909 = vpack.c.bf16 %v757, %v753
    %v910 = vpack.c.bf16 %v758, %v754
    %v911 = vpack.c.bf16 %v763, %v759
    %v912 = vpack.c.bf16 %v764, %v760
    %v913 = vpack.c.bf16 %v765, %v761
    %v914 = vpack.c.bf16 %v766, %v762
    %v915 = vpack.c.bf16 %v771, %v767
    %v916 = vpack.c.bf16 %v772, %v768
    %v917 = vpack.c.bf16 %v773, %v769
    %v918 = vpack.c.bf16 %v774, %v770
    %v919 = vpack.c.bf16 %v779, %v775
    %v920 = vpack.c.bf16 %v780, %v776
    %v921 = vpack.c.bf16 %v781, %v777
    %v922 = vpack.c.bf16 %v782, %v778
    %v923 = vpack.c.bf16 %v787, %v783
    %v924 = vpack.c.bf16 %v788, %v784
    %v925 = vpack.c.bf16 %v789, %v785
    %v926 = vpack.c.bf16 %v790, %v786
    %v927 = vpack.c.bf16 %v795, %v791
    %v928 = vpack.c.bf16 %v796, %v792
    %v929 = vpack.c.bf16 %v797, %v793
    %v930 = vpack.c.bf16 %v798, %v794
    %v931 = vpack.c.bf16 %v803, %v799
    %v932 = vpack.c.bf16 %v804, %v800
    %v933 = vpack.c.bf16 %v805, %v801
    %v934 = vpack.c.bf16 %v806, %v802
    %935 = vmatpush.bf16.msra.mxu0 %v835
    %936 = vmatpush.bf16.msra.mxu0 %v831
    %937 = vmatpush.bf16.msra.mxu0 %v827
    %938 = vmatpush.bf16.msra.mxu0 %v823
    %939 = vmatpush.bf16.msra.mxu0 %v819
    %940 = vmatpush.bf16.msra.mxu0 %v815
    %941 = vmatpush.bf16.msra.mxu0 %v811
    %942 = vmatpush.bf16.msra.mxu0 %v807
    %943 = vmatmul.bf16.gmra.mxu0 %v227
    %v944 = vpop.f32.mrf.mxu0
    %v945 = vadd.f32 0.0, %v944
    %v946 = vpop.f32.mrf.mxu0
    %947 = vdwg.mxu0
    %948 = vmatpush.bf16.msra.mxu0 %v867
    %949 = vmatpush.bf16.msra.mxu0 %v863
    %950 = vmatpush.bf16.msra.mxu0 %v859
    %951 = vmatpush.bf16.msra.mxu0 %v855
    %952 = vmatpush.bf16.msra.mxu0 %v851
    %953 = vmatpush.bf16.msra.mxu0 %v847
    %954 = vmatpush.bf16.msra.mxu0 %v843
    %955 = vmatpush.bf16.msra.mxu0 %v839
    %956 = vmatmul.bf16.gmra.mxu0 %v228
    %v957 = vpop.f32.mrf.mxu0
    %v958 = vadd.f32 %v945, %v957
    %v959 = vpop.f32.mrf.mxu0
    %960 = vdwg.mxu0
    %961 = vmatpush.bf16.msra.mxu0 %v899
    %962 = vmatpush.bf16.msra.mxu0 %v895
    %963 = vmatpush.bf16.msra.mxu0 %v891
    %964 = vmatpush.bf16.msra.mxu0 %v887
    %965 = vmatpush.bf16.msra.mxu0 %v883
    %966 = vmatpush.bf16.msra.mxu0 %v879
    %967 = vmatpush.bf16.msra.mxu0 %v875
    %968 = vmatpush.bf16.msra.mxu0 %v871
    %969 = vmatmul.bf16.gmra.mxu0 %v229
    %v970 = vpop.f32.mrf.mxu0
    %v971 = vadd.f32 %v958, %v970
    %v972 = vpop.f32.mrf.mxu0
    %973 = vdwg.mxu0
    %974 = vmatpush.bf16.msra.mxu0 %v931
    %975 = vmatpush.bf16.msra.mxu0 %v927
    %976 = vmatpush.bf16.msra.mxu0 %v923
    %977 = vmatpush.bf16.msra.mxu0 %v919
    %978 = vmatpush.bf16.msra.mxu0 %v915
    %979 = vmatpush.bf16.msra.mxu0 %v911
    %980 = vmatpush.bf16.msra.mxu0 %v907
    %981 = vmatpush.bf16.msra.mxu0 %v903
    %982 = vmatmul.bf16.gmra.mxu0 %v230
    %v983 = vpop.f32.mrf.mxu0
    %v984 = vadd.f32 %v971, %v983
    %v985 = vpop.f32.mrf.mxu0
    %986 = vdwg.mxu0
    %987 = vmatpush.bf16.msra.mxu0 %v836
    %988 = vmatpush.bf16.msra.mxu0 %v832
    %989 = vmatpush.bf16.msra.mxu0 %v828
    %990 = vmatpush.bf16.msra.mxu0 %v824
    %991 = vmatpush.bf16.msra.mxu0 %v820
    %992 = vmatpush.bf16.msra.mxu0 %v816
    %993 = vmatpush.bf16.msra.mxu0 %v812
    %994 = vmatpush.bf16.msra.mxu0 %v808
    %995 = vmatmul.bf16.gmra.mxu0 %v227
    %v996 = vpop.f32.mrf.mxu0
    %v997 = vadd.f32 0.0, %v996
    %v998 = vpop.f32.mrf.mxu0
    %999 = vdwg.mxu0
    %1000 = vmatpush.bf16.msra.mxu0 %v868
    %1001 = vmatpush.bf16.msra.mxu0 %v864
    %1002 = vmatpush.bf16.msra.mxu0 %v860
    %1003 = vmatpush.bf16.msra.mxu0 %v856
    %1004 = vmatpush.bf16.msra.mxu0 %v852
    %1005 = vmatpush.bf16.msra.mxu0 %v848
    %1006 = vmatpush.bf16.msra.mxu0 %v844
    %1007 = vmatpush.bf16.msra.mxu0 %v840
    %1008 = vmatmul.bf16.gmra.mxu0 %v228
    %v1009 = vpop.f32.mrf.mxu0
    %v1010 = vadd.f32 %v997, %v1009
    %v1011 = vpop.f32.mrf.mxu0
    %1012 = vdwg.mxu0
    %1013 = vmatpush.bf16.msra.mxu0 %v900
    %1014 = vmatpush.bf16.msra.mxu0 %v896
    %1015 = vmatpush.bf16.msra.mxu0 %v892
    %1016 = vmatpush.bf16.msra.mxu0 %v888
    %1017 = vmatpush.bf16.msra.mxu0 %v884
    %1018 = vmatpush.bf16.msra.mxu0 %v880
    %1019 = vmatpush.bf16.msra.mxu0 %v876
    %1020 = vmatpush.bf16.msra.mxu0 %v872
    %1021 = vmatmul.bf16.gmra.mxu0 %v229
    %v1022 = vpop.f32.mrf.mxu0
    %v1023 = vadd.f32 %v1010, %v1022
    %v1024 = vpop.f32.mrf.mxu0
    %1025 = vdwg.mxu0
    %1026 = vmatpush.bf16.msra.mxu0 %v932
    %1027 = vmatpush.bf16.msra.mxu0 %v928
    %1028 = vmatpush.bf16.msra.mxu0 %v924
    %1029 = vmatpush.bf16.msra.mxu0 %v920
    %1030 = vmatpush.bf16.msra.mxu0 %v916
    %1031 = vmatpush.bf16.msra.mxu0 %v912
    %1032 = vmatpush.bf16.msra.mxu0 %v908
    %1033 = vmatpush.bf16.msra.mxu0 %v904
    %1034 = vmatmul.bf16.gmra.mxu0 %v230
    %v1035 = vpop.f32.mrf.mxu0
    %v1036 = vadd.f32 %v1023, %v1035
    %v1037 = vpop.f32.mrf.mxu0
    %1038 = vdwg.mxu0
    %1039 = vmatpush.bf16.msra.mxu0 %v837
    %1040 = vmatpush.bf16.msra.mxu0 %v833
    %1041 = vmatpush.bf16.msra.mxu0 %v829
    %1042 = vmatpush.bf16.msra.mxu0 %v825
    %1043 = vmatpush.bf16.msra.mxu0 %v821
    %1044 = vmatpush.bf16.msra.mxu0 %v817
    %1045 = vmatpush.bf16.msra.mxu0 %v813
    %1046 = vmatpush.bf16.msra.mxu0 %v809
    %1047 = vmatmul.bf16.gmra.mxu0 %v227
    %v1048 = vpop.f32.mrf.mxu0
    %v1049 = vadd.f32 0.0, %v1048
    %v1050 = vpop.f32.mrf.mxu0
    %1051 = vdwg.mxu0
    %1052 = vmatpush.bf16.msra.mxu0 %v869
    %1053 = vmatpush.bf16.msra.mxu0 %v865
    %1054 = vmatpush.bf16.msra.mxu0 %v861
    %1055 = vmatpush.bf16.msra.mxu0 %v857
    %1056 = vmatpush.bf16.msra.mxu0 %v853
    %1057 = vmatpush.bf16.msra.mxu0 %v849
    %1058 = vmatpush.bf16.msra.mxu0 %v845
    %1059 = vmatpush.bf16.msra.mxu0 %v841
    %1060 = vmatmul.bf16.gmra.mxu0 %v228
    %v1061 = vpop.f32.mrf.mxu0
    %v1062 = vadd.f32 %v1049, %v1061
    %v1063 = vpop.f32.mrf.mxu0
    %1064 = vdwg.mxu0
    %1065 = vmatpush.bf16.msra.mxu0 %v901
    %1066 = vmatpush.bf16.msra.mxu0 %v897
    %1067 = vmatpush.bf16.msra.mxu0 %v893
    %1068 = vmatpush.bf16.msra.mxu0 %v889
    %1069 = vmatpush.bf16.msra.mxu0 %v885
    %1070 = vmatpush.bf16.msra.mxu0 %v881
    %1071 = vmatpush.bf16.msra.mxu0 %v877
    %1072 = vmatpush.bf16.msra.mxu0 %v873
    %1073 = vmatmul.bf16.gmra.mxu0 %v229
    %v1074 = vpop.f32.mrf.mxu0
    %v1075 = vadd.f32 %v1062, %v1074
    %v1076 = vpop.f32.mrf.mxu0
    %1077 = vdwg.mxu0
    %1078 = vmatpush.bf16.msra.mxu0 %v933
    %1079 = vmatpush.bf16.msra.mxu0 %v929
    %1080 = vmatpush.bf16.msra.mxu0 %v925
    %1081 = vmatpush.bf16.msra.mxu0 %v921
    %1082 = vmatpush.bf16.msra.mxu0 %v917
    %1083 = vmatpush.bf16.msra.mxu0 %v913
    %1084 = vmatpush.bf16.msra.mxu0 %v909
    %1085 = vmatpush.bf16.msra.mxu0 %v905
    %1086 = vmatmul.bf16.gmra.mxu0 %v230
    %v1087 = vpop.f32.mrf.mxu0
    %v1088 = vadd.f32 %v1075, %v1087
    %v1089 = vpop.f32.mrf.mxu0
    %1090 = vdwg.mxu0
    %1091 = vmatpush.bf16.msra.mxu0 %v838
    %1092 = vmatpush.bf16.msra.mxu0 %v834
    %1093 = vmatpush.bf16.msra.mxu0 %v830
    %1094 = vmatpush.bf16.msra.mxu0 %v826
    %1095 = vmatpush.bf16.msra.mxu0 %v822
    %1096 = vmatpush.bf16.msra.mxu0 %v818
    %1097 = vmatpush.bf16.msra.mxu0 %v814
    %1098 = vmatpush.bf16.msra.mxu0 %v810
    %1099 = vmatmul.bf16.gmra.mxu0 %v227
    %v1100 = vpop.f32.mrf.mxu0
    %v1101 = vadd.f32 0.0, %v1100
    %v1102 = vpop.f32.mrf.mxu0
    %1103 = vdwg.mxu0
    %1104 = vmatpush.bf16.msra.mxu0 %v870
    %1105 = vmatpush.bf16.msra.mxu0 %v866
    %1106 = vmatpush.bf16.msra.mxu0 %v862
    %1107 = vmatpush.bf16.msra.mxu0 %v858
    %1108 = vmatpush.bf16.msra.mxu0 %v854
    %1109 = vmatpush.bf16.msra.mxu0 %v850
    %1110 = vmatpush.bf16.msra.mxu0 %v846
    %1111 = vmatpush.bf16.msra.mxu0 %v842
    %1112 = vmatmul.bf16.gmra.mxu0 %v228
    %v1113 = vpop.f32.mrf.mxu0
    %v1114 = vadd.f32 %v1101, %v1113
    %v1115 = vpop.f32.mrf.mxu0
    %1116 = vdwg.mxu0
    %1117 = vmatpush.bf16.msra.mxu0 %v902
    %1118 = vmatpush.bf16.msra.mxu0 %v898
    %1119 = vmatpush.bf16.msra.mxu0 %v894
    %1120 = vmatpush.bf16.msra.mxu0 %v890
    %1121 = vmatpush.bf16.msra.mxu0 %v886
    %1122 = vmatpush.bf16.msra.mxu0 %v882
    %1123 = vmatpush.bf16.msra.mxu0 %v878
    %1124 = vmatpush.bf16.msra.mxu0 %v874
    %1125 = vmatmul.bf16.gmra.mxu0 %v229
    %v1126 = vpop.f32.mrf.mxu0
    %v1127 = vadd.f32 %v1114, %v1126
    %v1128 = vpop.f32.mrf.mxu0
    %1129 = vdwg.mxu0
    %1130 = vmatpush.bf16.msra.mxu0 %v934
    %1131 = vmatpush.bf16.msra.mxu0 %v930
    %1132 = vmatpush.bf16.msra.mxu0 %v926
    %1133 = vmatpush.bf16.msra.mxu0 %v922
    %1134 = vmatpush.bf16.msra.mxu0 %v918
    %1135 = vmatpush.bf16.msra.mxu0 %v914
    %1136 = vmatpush.bf16.msra.mxu0 %v910
    %1137 = vmatpush.bf16.msra.mxu0 %v906
    %1138 = vmatmul.bf16.gmra.mxu0 %v230
    %v1139 = vpop.f32.mrf.mxu0
    %v1140 = vadd.f32 %v1127, %v1139
    %v1141 = vpop.f32.mrf.mxu0
    %1142 = vdwg.mxu0
    %v1143 = vld [vmem:[%s4] sm:$0xf]
    %v1145 = vperm.slane %v1143, 0
    %v1146 = vperm.slane %v1143, 1
    %v1147 = vperm.slane %v1143, 2
    %v1148 = vperm.slane %v1143, 3
    %v1153 = vmul.f32 %v984, %v1145
    %v1154 = vmul.f32 %v1036, %v1146
    %v1155 = vmul.f32 %v1088, %v1147
    %v1156 = vmul.f32 %v1140, %v1148
    %v1157 = vld [vmem:[%s5] sm:$0xf]
    %v1159 = vperm.slane %v1157, 0
    %v1160 = vperm.slane %v1157, 1
    %v1161 = vperm.slane %v1157, 2
    %v1162 = vperm.slane %v1157, 3
    %v1167 = vadd.f32 %v1153, %v1159
    %v1168 = vadd.f32 %v1154, %v1160
    %v1169 = vadd.f32 %v1155, %v1161
    %v1170 = vadd.f32 %v1156, %v1162
    %v1171 = vmul.f32 %v1167, 0.5
    %v1172 = vmul.f32 %v1168, 0.5
    %v1173 = vmul.f32 %v1169, 0.5
    %v1174 = vmul.f32 %v1170, 0.5
    %v1175 = vmul.f32 %v1167, 0.044715
    %v1176 = vmul.f32 %v1168, 0.044715
    %v1177 = vmul.f32 %v1169, 0.044715
    %v1178 = vmul.f32 %v1170, 0.044715
    %v1179 = vmul.f32 %v1175, %v1167
    %v1180 = vmul.f32 %v1176, %v1168
    %v1181 = vmul.f32 %v1177, %v1169
    %v1182 = vmul.f32 %v1178, %v1170
    %v1183 = vmul.f32 %v1179, %v1167
    %v1184 = vmul.f32 %v1180, %v1168
    %v1185 = vmul.f32 %v1181, %v1169
    %v1186 = vmul.f32 %v1182, %v1170
    %v1187 = vadd.f32 %v1167, %v1183
    %v1188 = vadd.f32 %v1168, %v1184
    %v1189 = vadd.f32 %v1169, %v1185
    %v1190 = vadd.f32 %v1170, %v1186
    %v1191 = vmul.f32 %v1187, 0.7978846
    %v1192 = vmul.f32 %v1188, 0.7978846
    %v1193 = vmul.f32 %v1189, 0.7978846
    %v1194 = vmul.f32 %v1190, 0.7978846
    %v1195 = vtanh.pop %v1191
    %v1196 = vtanh.pop %v1192
    %v1197 = vtanh.pop %v1193
    %v1198 = vtanh.pop %v1194
    %v1199 = vadd.f32 %v1195, 1.0
    %v1200 = vadd.f32 %v1196, 1.0
    %v1201 = vadd.f32 %v1197, 1.0
    %v1202 = vadd.f32 %v1198, 1.0
    %v1203 = vmul.f32 %v1171, %v1199
    %v1204 = vmul.f32 %v1172, %v1200
    %v1205 = vmul.f32 %v1173, %v1201
    %v1206 = vmul.f32 %v1174, %v1202
    %v1207 = vpack.c.bf16 %v1203, %v1203
    %v1208 = vpack.c.bf16 %v1204, %v1204
    %v1209 = vpack.c.bf16 %v1205, %v1205
    %v1210 = vpack.c.bf16 %v1206, %v1206
    %v1211 = vld [vmem:[%s6] sm:$0xf]
    %v1212 = vld [vmem:[%s6 + $0x4] sm:$0xf]
    %v1213 = vld [vmem:[%s6 + $0x8] sm:$0xf]
    %v1214 = vld [vmem:[%s6 + $0xc] sm:$0xf]
    %v1215 = vld [vmem:[%s6 + $0x10] sm:$0xf]
    %v1216 = vld [vmem:[%s6 + $0x14] sm:$0xf]
    %v1217 = vld [vmem:[%s6 + $0x18] sm:$0xf]
    %v1218 = vld [vmem:[%s6 + $0x1c] sm:$0xf]
    %v1219 = vld [vmem:[%s6 + $0x20] sm:$0xf]
    %v1220 = vld [vmem:[%s6 + $0x24] sm:$0xf]
    %v1221 = vld [vmem:[%s6 + $0x28] sm:$0xf]
    %v1222 = vld [vmem:[%s6 + $0x2c] sm:$0xf]
    %v1223 = vld [vmem:[%s6 + $0x30] sm:$0xf]
    %v1224 = vld [vmem:[%s6 + $0x34] sm:$0xf]
    %v1225 = vld [vmem:[%s6 + $0x38] sm:$0xf]
    %v1226 = vld [vmem:[%s6 + $0x3c] sm:$0xf]
    %v1227 = vld [vmem:[%s6 + $0x40] sm:$0xf]
    %v1228 = vld [vmem:[%s6 + $0x44] sm:$0xf]
    %v1229 = vld [vmem:[%s6 + $0x48] sm:$0xf]
    %v1230 = vld [vmem:[%s6 + $0x4c] sm:$0xf]
    %v1231 = vld [vmem:[%s6 + $0x50] sm:$0xf]
    %v1232 = vld [vmem:[%s6 + $0x54] sm:$0xf]
    %v1233 = vld [vmem:[%s6 + $0x58] sm:$0xf]
    %v1234 = vld [vmem:[%s6 + $0x5c] sm:$0xf]
    %v1235 = vld [vmem:[%s6 + $0x60] sm:$0xf]
    %v1236 = vld [vmem:[%s6 + $0x64] sm:$0xf]
    %v1237 = vld [vmem:[%s6 + $0x68] sm:$0xf]
    %v1238 = vld [vmem:[%s6 + $0x6c] sm:$0xf]
    %v1239 = vld [vmem:[%s6 + $0x70] sm:$0xf]
    %v1240 = vld [vmem:[%s6 + $0x74] sm:$0xf]
    %v1241 = vld [vmem:[%s6 + $0x78] sm:$0xf]
    %v1242 = vld [vmem:[%s6 + $0x7c] sm:$0xf]
    %v1243 = vld [vmem:[%s6 + $0x80] sm:$0xf]
    %v1244 = vld [vmem:[%s6 + $0x84] sm:$0xf]
    %v1245 = vld [vmem:[%s6 + $0x88] sm:$0xf]
    %v1246 = vld [vmem:[%s6 + $0x8c] sm:$0xf]
    %v1247 = vld [vmem:[%s6 + $0x90] sm:$0xf]
    %v1248 = vld [vmem:[%s6 + $0x94] sm:$0xf]
    %v1249 = vld [vmem:[%s6 + $0x98] sm:$0xf]
    %v1250 = vld [vmem:[%s6 + $0x9c] sm:$0xf]
    %v1251 = vld [vmem:[%s6 + $0xa0] sm:$0xf]
    %v1252 = vld [vmem:[%s6 + $0xa4] sm:$0xf]
    %v1253 = vld [vmem:[%s6 + $0xa8] sm:$0xf]
    %v1254 = vld [vmem:[%s6 + $0xac] sm:$0xf]
    %v1255 = vld [vmem:[%s6 + $0xb0] sm:$0xf]
    %v1256 = vld [vmem:[%s6 + $0xb4] sm:$0xf]
    %v1257 = vld [vmem:[%s6 + $0xb8] sm:$0xf]
    %v1258 = vld [vmem:[%s6 + $0xbc] sm:$0xf]
    %v1259 = vld [vmem:[%s6 + $0xc0] sm:$0xf]
    %v1260 = vld [vmem:[%s6 + $0xc4] sm:$0xf]
    %v1261 = vld [vmem:[%s6 + $0xc8] sm:$0xf]
    %v1262 = vld [vmem:[%s6 + $0xcc] sm:$0xf]
    %v1263 = vld [vmem:[%s6 + $0xd0] sm:$0xf]
    %v1264 = vld [vmem:[%s6 + $0xd4] sm:$0xf]
    %v1265 = vld [vmem:[%s6 + $0xd8] sm:$0xf]
    %v1266 = vld [vmem:[%s6 + $0xdc] sm:$0xf]
    %v1267 = vld [vmem:[%s6 + $0xe0] sm:$0xf]
    %v1268 = vld [vmem:[%s6 + $0xe4] sm:$0xf]
    %v1269 = vld [vmem:[%s6 + $0xe8] sm:$0xf]
    %v1270 = vld [vmem:[%s6 + $0xec] sm:$0xf]
    %v1271 = vld [vmem:[%s6 + $0xf0] sm:$0xf]
    %v1272 = vld [vmem:[%s6 + $0xf4] sm:$0xf]
    %v1273 = vld [vmem:[%s6 + $0xf8] sm:$0xf]
    %v1274 = vld [vmem:[%s6 + $0xfc] sm:$0xf]
    %v1275 = vld [vmem:[%s7] sm:$0x1]
    %v1277 = vperm.slane %v1275, 0
    %v1343 = vunpack.c.l.b16 %v1211
    %v1344 = vunpack.c.l.b16 %v1212
    %v1345 = vunpack.c.l.b16 %v1213
    %v1346 = vunpack.c.l.b16 %v1214
    %v1347 = vunpack.c.l.b16 %v1215
    %v1348 = vunpack.c.l.b16 %v1216
    %v1349 = vunpack.c.l.b16 %v1217
    %v1350 = vunpack.c.l.b16 %v1218
    %v1351 = vunpack.c.l.b16 %v1219
    %v1352 = vunpack.c.l.b16 %v1220
    %v1353 = vunpack.c.l.b16 %v1221
    %v1354 = vunpack.c.l.b16 %v1222
    %v1355 = vunpack.c.l.b16 %v1223
    %v1356 = vunpack.c.l.b16 %v1224
    %v1357 = vunpack.c.l.b16 %v1225
    %v1358 = vunpack.c.l.b16 %v1226
    %v1359 = vunpack.c.l.b16 %v1227
    %v1360 = vunpack.c.l.b16 %v1228
    %v1361 = vunpack.c.l.b16 %v1229
    %v1362 = vunpack.c.l.b16 %v1230
    %v1363 = vunpack.c.l.b16 %v1231
    %v1364 = vunpack.c.l.b16 %v1232
    %v1365 = vunpack.c.l.b16 %v1233
    %v1366 = vunpack.c.l.b16 %v1234
    %v1367 = vunpack.c.l.b16 %v1235
    %v1368 = vunpack.c.l.b16 %v1236
    %v1369 = vunpack.c.l.b16 %v1237
    %v1370 = vunpack.c.l.b16 %v1238
    %v1371 = vunpack.c.l.b16 %v1239
    %v1372 = vunpack.c.l.b16 %v1240
    %v1373 = vunpack.c.l.b16 %v1241
    %v1374 = vunpack.c.l.b16 %v1242
    %v1375 = vunpack.c.l.b16 %v1243
    %v1376 = vunpack.c.l.b16 %v1244
    %v1377 = vunpack.c.l.b16 %v1245
    %v1378 = vunpack.c.l.b16 %v1246
    %v1379 = vunpack.c.l.b16 %v1247
    %v1380 = vunpack.c.l.b16 %v1248
    %v1381 = vunpack.c.l.b16 %v1249
    %v1382 = vunpack.c.l.b16 %v1250
    %v1383 = vunpack.c.l.b16 %v1251
    %v1384 = vunpack.c.l.b16 %v1252
    %v1385 = vunpack.c.l.b16 %v1253
    %v1386 = vunpack.c.l.b16 %v1254
    %v1387 = vunpack.c.l.b16 %v1255
    %v1388 = vunpack.c.l.b16 %v1256
    %v1389 = vunpack.c.l.b16 %v1257
    %v1390 = vunpack.c.l.b16 %v1258
    %v1391 = vunpack.c.l.b16 %v1259
    %v1392 = vunpack.c.l.b16 %v1260
    %v1393 = vunpack.c.l.b16 %v1261
    %v1394 = vunpack.c.l.b16 %v1262
    %v1395 = vunpack.c.l.b16 %v1263
    %v1396 = vunpack.c.l.b16 %v1264
    %v1397 = vunpack.c.l.b16 %v1265
    %v1398 = vunpack.c.l.b16 %v1266
    %v1399 = vunpack.c.l.b16 %v1267
    %v1400 = vunpack.c.l.b16 %v1268
    %v1401 = vunpack.c.l.b16 %v1269
    %v1402 = vunpack.c.l.b16 %v1270
    %v1403 = vunpack.c.l.b16 %v1271
    %v1404 = vunpack.c.l.b16 %v1272
    %v1405 = vunpack.c.l.b16 %v1273
    %v1406 = vunpack.c.l.b16 %v1274
    %v1407 = vpack.c.b16 %v1344, %v1343
    %v1408 = vpack.c.b16 %v1346, %v1345
    %v1409 = vpack.c.b16 %v1348, %v1347
    %v1410 = vpack.c.b16 %v1350, %v1349
    %v1411 = vpack.c.b16 %v1352, %v1351
    %v1412 = vpack.c.b16 %v1354, %v1353
    %v1413 = vpack.c.b16 %v1356, %v1355
    %v1414 = vpack.c.b16 %v1358, %v1357
    %v1415 = vpack.c.b16 %v1360, %v1359
    %v1416 = vpack.c.b16 %v1362, %v1361
    %v1417 = vpack.c.b16 %v1364, %v1363
    %v1418 = vpack.c.b16 %v1366, %v1365
    %v1419 = vpack.c.b16 %v1368, %v1367
    %v1420 = vpack.c.b16 %v1370, %v1369
    %v1421 = vpack.c.b16 %v1372, %v1371
    %v1422 = vpack.c.b16 %v1374, %v1373
    %v1423 = vpack.c.b16 %v1376, %v1375
    %v1424 = vpack.c.b16 %v1378, %v1377
    %v1425 = vpack.c.b16 %v1380, %v1379
    %v1426 = vpack.c.b16 %v1382, %v1381
    %v1427 = vpack.c.b16 %v1384, %v1383
    %v1428 = vpack.c.b16 %v1386, %v1385
    %v1429 = vpack.c.b16 %v1388, %v1387
    %v1430 = vpack.c.b16 %v1390, %v1389
    %v1431 = vpack.c.b16 %v1392, %v1391
    %v1432 = vpack.c.b16 %v1394, %v1393
    %v1433 = vpack.c.b16 %v1396, %v1395
    %v1434 = vpack.c.b16 %v1398, %v1397
    %v1435 = vpack.c.b16 %v1400, %v1399
    %v1436 = vpack.c.b16 %v1402, %v1401
    %v1437 = vpack.c.b16 %v1404, %v1403
    %v1438 = vpack.c.b16 %v1406, %v1405
    %1471 = vmatpush.bf16.msra.mxu0 %v1414
    %1472 = vmatpush.bf16.msra.mxu0 %v1413
    %1473 = vmatpush.bf16.msra.mxu0 %v1412
    %1474 = vmatpush.bf16.msra.mxu0 %v1411
    %1475 = vmatpush.bf16.msra.mxu0 %v1410
    %1476 = vmatpush.bf16.msra.mxu0 %v1409
    %1477 = vmatpush.bf16.msra.mxu0 %v1408
    %1478 = vmatpush.bf16.msra.mxu0 %v1407
    %1479 = vmatmul.bf16.gmra.mxu0 %v1207
    %v1480 = vpop.f32.mrf.mxu0
    %v1481 = vadd.f32 %v1277, %v1480
    %v1482 = vpop.f32.mrf.mxu0
    %1483 = vdwg.mxu0
    %1484 = vmatpush.bf16.msra.mxu0 %v1422
    %1485 = vmatpush.bf16.msra.mxu0 %v1421
    %1486 = vmatpush.bf16.msra.mxu0 %v1420
    %1487 = vmatpush.bf16.msra.mxu0 %v1419
    %1488 = vmatpush.bf16.msra.mxu0 %v1418
    %1489 = vmatpush.bf16.msra.mxu0 %v1417
    %1490 = vmatpush.bf16.msra.mxu0 %v1416
    %1491 = vmatpush.bf16.msra.mxu0 %v1415
    %1492 = vmatmul.bf16.gmra.mxu0 %v1208
    %v1493 = vpop.f32.mrf.mxu0
    %v1494 = vadd.f32 %v1481, %v1493
    %v1495 = vpop.f32.mrf.mxu0
    %1496 = vdwg.mxu0
    %1497 = vmatpush.bf16.msra.mxu0 %v1430
    %1498 = vmatpush.bf16.msra.mxu0 %v1429
    %1499 = vmatpush.bf16.msra.mxu0 %v1428
    %1500 = vmatpush.bf16.msra.mxu0 %v1427
    %1501 = vmatpush.bf16.msra.mxu0 %v1426
    %1502 = vmatpush.bf16.msra.mxu0 %v1425
    %1503 = vmatpush.bf16.msra.mxu0 %v1424
    %1504 = vmatpush.bf16.msra.mxu0 %v1423
    %1505 = vmatmul.bf16.gmra.mxu0 %v1209
    %v1506 = vpop.f32.mrf.mxu0
    %v1507 = vadd.f32 %v1494, %v1506
    %v1508 = vpop.f32.mrf.mxu0
    %1509 = vdwg.mxu0
    %1510 = vmatpush.bf16.msra.mxu0 %v1438
    %1511 = vmatpush.bf16.msra.mxu0 %v1437
    %1512 = vmatpush.bf16.msra.mxu0 %v1436
    %1513 = vmatpush.bf16.msra.mxu0 %v1435
    %1514 = vmatpush.bf16.msra.mxu0 %v1434
    %1515 = vmatpush.bf16.msra.mxu0 %v1433
    %1516 = vmatpush.bf16.msra.mxu0 %v1432
    %1517 = vmatpush.bf16.msra.mxu0 %v1431
    %1518 = vmatmul.bf16.gmra.mxu0 %v1210
    %v1519 = vpop.f32.mrf.mxu0
    %v1520 = vadd.f32 %v1507, %v1519
    %v1521 = vpop.f32.mrf.mxu0
    %1522 = vdwg.mxu0
    %v1523 = vld [vmem:[%s8] sm:$0xf]
    %v1524 = vld [vmem:[%s8 + $0x4] sm:$0xf]
    %v1525 = vld [vmem:[%s9] sm:$0x1]
    %v1527 = vperm.slane %v1525, 0
    %v1531 = vunpack.c.l.b16 %v1523
    %v1532 = vunpack.c.l.b16 %v1524
    %v1533 = vpack.c.b16 %v1532, %v1531
    %1535 = vmatpush.bf16.msra.mxu0 0
    %1536 = vmatpush.bf16.msra.mxu0 0
    %1537 = vmatpush.bf16.msra.mxu0 0
    %1538 = vmatpush.bf16.msra.mxu0 0
    %1539 = vmatpush.bf16.msra.mxu0 0
    %1540 = vmatpush.bf16.msra.mxu0 0
    %1541 = vmatpush.bf16.msra.mxu0 0
    %1542 = vmatpush.bf16.msra.mxu0 %v1533
    %1543 = vmatmul.bf16.gmra.mxu0 %v137
    %v1544 = vpop.f32.mrf.mxu0
    %v1545 = vadd.f32 %v1527, %v1544
    %v1546 = vpop.f32.mrf.mxu0
    %1547 = vdwg.mxu0
    %v1548 = vadd.f32 %v1520, %v1545
    %v1549 = vmul.f32 %v1548, %v84
    %v1550 = vadd.f32 %v1549, %v65
    %vm1551 = vcmask 64512
    %1552 = vst.msk [vmem:[#allocation5] sm:$0xff] %vm1551, %v1550
    // Predicated region
    $region46: #{tpu_custom_call.1} parent=1 // pred_check
      _
    $region47: #{tpu_custom_call.1} parent=1 // pred_check_branch
      %1554 = sbr.rel (0) target = $region49
    $region48: #{tpu_custom_call.1} parent=1 // pred_region
      %1556 = vsyncadd [#allocation4], 0
      %s1558 = sshll.u32 [#allocation5], 4
      %s1559 = int_to_ptr.vmem [resolvable:$true] %s1558
      %s1560 = sshll.u32 %s10, 4
      %s1561 = int_to_ptr.hbm [resolvable:$true] %s1560
      %1563 = dma.vmem_to_hbm [thread:$0]  %s1559, 128, %s1561, [#allocation4]
    $region49: #{tpu_custom_call.1} parent=1 // pred_fallthru
      _
    // Predicated region
    $region50: #{tpu_custom_call.1} parent=1 // pred_check
      _
    $region51: #{tpu_custom_call.1} parent=1 // pred_check_branch
      %1565 = sbr.rel (0) target = $region53
    $region52: #{tpu_custom_call.1} parent=1 // pred_region
      %1567 = dma.done [#allocation4], 128
    $region53: #{tpu_custom_call.1} parent=1 // pred_fallthru
      _
    %1568 = vsyncpa [#allocation3], 1
    %1569 = vsyncpa [#allocation4], 1

</llo_original>
